<compile_context>
chip_gen: v7x
topology: tpu7x:2x2x1
jax: 0.10.0
libtpu: 0.0.40
codegen_flags: <defaults>
</compile_context>

<pallas_src>
import functools

import jax
import jax.numpy as jnp
from jax import lax
from jax.experimental import pallas as pl
from jax.experimental.pallas import tpu as pltpu

OUT_W_MIN = 128  # lane-dense output slab width


def _round16(n):
    return (n + 15) // 16 * 16


def _round_up(n, m):
    return (n + m - 1) // m * m


def _celu(z):
    # CELU with alpha=1.0 (PyTorch default): max(0,x) + min(0, exp(x)-1), in f32.
    return jnp.where(z > 0, z, jnp.exp(jnp.minimum(z, 0.0)) - 1.0)


# -----------------------------------------------------------------------------
# Kernel (one batch tile per grid step; weights/bias VMEM-resident)
# -----------------------------------------------------------------------------
def rainbow_kernel(x_ref, w_ref, b_ref, out_ref, *,
                   sd_pad, hidden, action_dim, l3w, out_w):
    H2 = 2 * hidden            # 512: fused [V | A] (and [head1 | head2]) width
    A = action_dim
    R1 = sd_pad                # layer-2 head-1 rows
    R2 = sd_pad + hidden       # layer-2 head-2 rows
    R3 = sd_pad + 2 * hidden   # layer-3 head-1 rows (transposed, lane-dense)
    R4 = R3 + l3w              # layer-3 head-2 rows
    # All offsets are multiples of 16 -> bf16 slices never cross a (16,128) tile.

    x = x_ref[...].astype(jnp.bfloat16)                       # (bb, sd_pad)

    # f32 bias rows
    b1 = b_ref[0:1, :]                                        # (1, 2H)
    b2_1 = b_ref[1:2, :]
    b2_2 = b_ref[2:3, :]
    b3_1 = b_ref[3:4, 0:l3w]                                  # (1, l3w)
    b3_2 = b_ref[4:5, 0:l3w]

    # ---- layer 1: both heads fused: x @ [W1_q1 | W1_q2] ----------------------
    w1 = w_ref[0:sd_pad, :]                                   # (sd_pad, 2H) bf16
    h_all = _celu(jnp.dot(x, w1, preferred_element_type=jnp.float32) + b1)

    # ---- layer 2, head 1: h1 @ [Wv2 | Wa2] -----------------------------------
    w2_1 = w_ref[R1:R1 + hidden, :]                           # (H, 2H) bf16
    hva1 = _celu(jnp.dot(h_all[:, :hidden].astype(jnp.bfloat16), w2_1,
                         preferred_element_type=jnp.float32) + b2_1)

    # ---- layer 2, head 2 ------------------------------------------------------
    w2_2 = w_ref[R2:R2 + hidden, :]                           # (H, 2H) bf16
    hva2 = _celu(jnp.dot(h_all[:, hidden:].astype(jnp.bfloat16), w2_2,
                         preferred_element_type=jnp.float32) + b2_2)

    # ---- layer 3: transposed block-diagonal [V ; A] head, one matmul per head.
    # Weight rows are lane-dense (l3w, 2H); contract the 2H axis (q @ k.T style).
    dn = (((1,), (1,)), ((), ()))
    w3t_1 = w_ref[R3:R3 + l3w, :]                             # (l3w, 2H) bf16
    va1 = lax.dot_general(hva1.astype(jnp.bfloat16), w3t_1, dn,
                          preferred_element_type=jnp.float32) + b3_1   # (bb, l3w)
    w3t_2 = w_ref[R4:R4 + l3w, :]
    va2 = lax.dot_general(hva2.astype(jnp.bfloat16), w3t_2, dn,
                          preferred_element_type=jnp.float32) + b3_2

    # ---- dueling combine ------------------------------------------------------
    a1 = va1[:, 1:1 + A]
    q1 = va1[:, 0:1] + a1 - jnp.mean(a1, axis=1, keepdims=True)
    a2 = va2[:, 1:1 + A]
    q2 = va2[:, 0:1] + a2 - jnp.mean(a2, axis=1, keepdims=True)

    # single lane-dense (bb, out_w) store; the wrapper slices q1/q2 back out
    pieces = [q1, q2]
    if out_w > 2 * A:
        pieces.append(jnp.zeros((q1.shape[0], out_w - 2 * A), jnp.float32))
    out_ref[...] = jnp.concatenate(pieces, axis=1)


# -----------------------------------------------------------------------------
# Wrapper
# -----------------------------------------------------------------------------
@functools.partial(jax.jit,
                   static_argnames=("state_dim", "action_dim", "hidden", "block_b"))
def rainbow_forward(x, w_slab, b_slab, *, state_dim, action_dim, hidden=256,
                    block_b=256):
    B = x.shape[0]
    H2 = 2 * hidden
    sd_pad = _round16(state_dim)
    l3w = _round16(1 + action_dim)
    slab_rows = sd_pad + 2 * hidden + 2 * l3w
    out_w = max(OUT_W_MIN, _round_up(2 * action_dim, 128))

    # Batch tiling: tile size (static) and zero-padding of x to (Bp, sd_pad).
    bb = min(block_b, _round_up(B, 8))
    Bp = _round_up(B, bb)
    xp = jnp.zeros((Bp, sd_pad), x.dtype).at[:B, :state_dim].set(x)
    grid = (Bp // bb,)

    kernel = functools.partial(rainbow_kernel, sd_pad=sd_pad, hidden=hidden,
                               action_dim=action_dim, l3w=l3w, out_w=out_w)

    flops = 2 * Bp * (sd_pad * H2 + 2 * hidden * H2 + 2 * H2 * l3w)
    transcendentals = 3 * Bp * H2
    bytes_accessed = (Bp * sd_pad * 4 + slab_rows * H2 * 2 + 8 * H2 * 4
                      + Bp * out_w * 4)

    out = pl.pallas_call(
        kernel,
        out_shape=jax.ShapeDtypeStruct((Bp, out_w), jnp.float32),
        grid=grid,
        in_specs=[
            pl.BlockSpec((bb, sd_pad), lambda i: (i, 0)),        # batch tile of x
            pl.BlockSpec((slab_rows, H2), lambda i: (0, 0)),     # weights: resident
            pl.BlockSpec((8, H2), lambda i: (0, 0)),             # bias: resident
        ],
        out_specs=pl.BlockSpec((bb, out_w), lambda i: (i, 0)),
        compiler_params=pltpu.CompilerParams(
            dimension_semantics=("parallel",)),                  # v7x megacore
        cost_estimate=pl.CostEstimate(
            flops=flops, transcendentals=transcendentals,
            bytes_accessed=bytes_accessed),
    )(xp, w_slab, b_slab)

    return out[:B, :action_dim], out[:B, action_dim:2 * action_dim]


# -----------------------------------------------------------------------------
# Parameter construction / packing
# -----------------------------------------------------------------------------
def _init_linear(key, fan_in, fan_out):
    """torch.nn.Linear default init: U(-1/sqrt(fan_in), 1/sqrt(fan_in)).
    Returns (W_T of shape (fan_in, fan_out), b of shape (1, fan_out))."""
    kw, kb = jax.random.split(key)
    bound = 1.0 / jnp.sqrt(jnp.float32(fan_in))
    w = jax.random.uniform(kw, (fan_in, fan_out), jnp.float32, -bound, bound)
    b = jax.random.uniform(kb, (1, fan_out), jnp.float32, -bound, bound)
    return w, b


def make_raw_params(key, state_dim, action_dim, hidden=256):
    """Flat tuple of 20 f32 arrays in module order: per head (fc1, fc2_V, fc2_A, V, A)."""
    layer_dims = [
        (state_dim, hidden),   # q*_fc1
        (hidden, hidden),      # q*_fc2_V
        (hidden, hidden),      # q*_fc2_A
        (hidden, 1),           # q*_V
        (hidden, action_dim),  # q*_A
    ]
    keys = jax.random.split(key, 2 * len(layer_dims))
    params = []
    for i, (fi, fo) in enumerate(layer_dims + layer_dims):
        w, b = _init_linear(keys[i], fi, fo)
        params.extend([w, b])
    return tuple(params)


def pack_params(raw, state_dim, action_dim, hidden=256):
    """Pack the 20 raw params into one bf16 weight slab + one small f32 bias slab."""
    (q1_w1, q1_b1, q1_wv2, q1_bv2, q1_wa2, q1_ba2, q1_wv, q1_bv, q1_wa, q1_ba,
     q2_w1, q2_b1, q2_wv2, q2_bv2, q2_wa2, q2_ba2, q2_wv, q2_bv, q2_wa, q2_ba) = raw
    H2 = 2 * hidden
    A = action_dim
    sd_pad = _round16(state_dim)
    l3w = _round16(1 + A)
    rows = sd_pad + 2 * hidden + 2 * l3w

    w = jnp.zeros((rows, H2), jnp.float32)
    # layer 1, both heads fused along lanes
    w = w.at[0:state_dim, :].set(jnp.concatenate([q1_w1, q2_w1], axis=1))
    # layer 2, per head: [Wv2 | Wa2]
    w = w.at[sd_pad:sd_pad + hidden, :].set(
        jnp.concatenate([q1_wv2, q1_wa2], axis=1))
    w = w.at[sd_pad + hidden:sd_pad + 2 * hidden, :].set(
        jnp.concatenate([q2_wv2, q2_wa2], axis=1))
    # layer 3, per head: TRANSPOSED block-diagonal, lane-dense (l3w, 2H) rows:
    #   row 0   : cols [0:H)   = wv^T   (value column)
    #   rows 1:A: cols [H:2H)  = wa^T   (advantage rows)
    r3 = sd_pad + 2 * hidden
    w = w.at[r3:r3 + 1, 0:hidden].set(q1_wv.T)
    w = w.at[r3 + 1:r3 + 1 + A, hidden:H2].set(q1_wa.T)
    r4 = r3 + l3w
    w = w.at[r4:r4 + 1, 0:hidden].set(q2_wv.T)
    w = w.at[r4 + 1:r4 + 1 + A, hidden:H2].set(q2_wa.T)

    # f32 bias slab (8 rows, 2H lanes); rows 3/4 only use the first 1+A lanes
    bias = jnp.zeros((8, H2), jnp.float32)
    bias = bias.at[0:1, :].set(jnp.concatenate([q1_b1, q2_b1], axis=1))
    bias = bias.at[1:2, :].set(jnp.concatenate([q1_bv2, q1_ba2], axis=1))
    bias = bias.at[2:3, :].set(jnp.concatenate([q2_bv2, q2_ba2], axis=1))
    bias = bias.at[3:4, 0:1 + A].set(jnp.concatenate([q1_bv, q1_ba], axis=1))
    bias = bias.at[4:5, 0:1 + A].set(jnp.concatenate([q2_bv, q2_ba], axis=1))

    return w.astype(jnp.bfloat16), bias


# -----------------------------------------------------------------------------
# References
# -----------------------------------------------------------------------------
def reference_bf16(x, raw, action_dim, hidden=256):
    """Mirrors kernel numerics: bf16 weights + bf16 activation inputs, f32 accumulate."""
    xb = x.astype(jnp.bfloat16)

    def head(p):
        w1, b1, wv2, bv2, wa2, ba2, wv, bv, wa, ba = p
        bf = lambda w: w.astype(jnp.bfloat16)
        h = _celu(jnp.dot(xb, bf(w1), preferred_element_type=jnp.float32) + b1)
        hb = h.astype(jnp.bfloat16)
        hv = _celu(jnp.dot(hb, bf(wv2), preferred_element_type=jnp.float32) + bv2)
        ha = _celu(jnp.dot(hb, bf(wa2), preferred_element_type=jnp.float32) + ba2)
        v = jnp.dot(hv.astype(jnp.bfloat16), bf(wv), preferred_element_type=jnp.float32) + bv
        a = jnp.dot(ha.astype(jnp.bfloat16), bf(wa), preferred_element_type=jnp.float32) + ba
        return v + a - jnp.mean(a, axis=1, keepdims=True)

    return head(raw[:10]), head(raw[10:])


def reference_f32(x, raw, action_dim):
    """Exact-module-semantics f32 reference (loose structural sanity check)."""
    def head(p):
        w1, b1, wv2, bv2, wa2, ba2, wv, bv, wa, ba = p
        h = _celu(x @ w1 + b1)
        hv = _celu(h @ wv2 + bv2)
        ha = _celu(h @ wa2 + ba2)
        v = hv @ wv + bv
        a = ha @ wa + ba
        return v + a - jnp.mean(a, axis=1, keepdims=True)

    return head(raw[:10]), head(raw[10:])


# -----------------------------------------------------------------------------
if __name__ == "__main__":
    state_dim = 24     # rounds to 32 -> exercises the 16-aligned slab padding
    action_dim = 8
    hidden = 256       # fixed by the module

    key = jax.random.PRNGKey(0)
    kx, kp = jax.random.split(key)

    raw = make_raw_params(kp, state_dim, action_dim, hidden)
    w_slab, b_slab = pack_params(raw, state_dim, action_dim, hidden)

    # batch=300 with 128-row tiles -> 3 grid steps (exercises pipelining / padding);
    # batch=2 checks the tiny-shape path of the original module.
    for batch in (2, 300):
        x = jax.random.normal(jax.random.fold_in(kx, batch),
                              (batch, state_dim), dtype=jnp.float32)
        q1, q2 = rainbow_forward(x, w_slab, b_slab,
                                 state_dim=state_dim, action_dim=action_dim,
                                 hidden=hidden, block_b=128)
        jax.block_until_ready((q1, q2))

        rb1, rb2 = reference_bf16(x, raw, action_dim, hidden)   # tight (bf16-matched)
        rf1, rf2 = reference_f32(x, raw, action_dim)            # loose (exact f32 module)

        assert q1.shape == (batch, action_dim) and q2.shape == (batch, action_dim)
        assert jnp.allclose(q1, rb1, atol=5e-3, rtol=5e-3), "q1 mismatch vs bf16 reference"
        assert jnp.allclose(q2, rb2, atol=5e-3, rtol=5e-3), "q2 mismatch vs bf16 reference"
        assert jnp.allclose(q1, rf1, atol=5e-2, rtol=5e-2), "q1 mismatch vs f32 reference"
        assert jnp.allclose(q2, rf2, atol=5e-2, rtol=5e-2), "q2 mismatch vs f32 reference"

    print("KERNEL_OK")
</pallas_src>

<mosaic_0001>
module attributes {stable_mosaic.version = 11 : i64} {
  func.func @rainbow_kernel(%arg0: i32, %arg1: memref<8x32xf32, #tpu.memory_space<vmem>>, %arg2: memref<576x512xbf16, #tpu.memory_space<vmem>>, %arg3: memref<8x512xf32, #tpu.memory_space<vmem>>, %arg4: memref<8x128xf32, #tpu.memory_space<vmem>>) attributes {dimension_semantics = [#tpu.dimension_semantics<parallel>], iteration_bounds = array<i64: 1>, scalar_prefetch = 0 : i64, scratch_operands = 0 : i64, tpu.core_type = #tpu.core_type<tc>, window_params = [{transform_indices = @transform_0, window_bounds = array<i64: 8, 32>}, {pipeline_mode = #tpu.pipeline_mode<synchronous>, transform_indices = @transform_1, window_bounds = array<i64: 576, 512>}, {pipeline_mode = #tpu.pipeline_mode<synchronous>, transform_indices = @transform_2, window_bounds = array<i64: 8, 512>}, {transform_indices = @transform_3, window_bounds = array<i64: 8, 128>}]} {
    %c0 = arith.constant 0 : index
    %c0_0 = arith.constant 0 : index
    %0 = vector.load %arg1[%c0, %c0_0] : memref<8x32xf32, #tpu.memory_space<vmem>>, vector<8x32xf32>
    %1 = arith.truncf %0 : vector<8x32xf32> to vector<8x32xbf16>
    %c0_1 = arith.constant 0 : index
    %c0_2 = arith.constant 0 : index
    %2 = vector.load %arg3[%c0_1, %c0_2] : memref<8x512xf32, #tpu.memory_space<vmem>>, vector<1x512xf32>
    %c1 = arith.constant 1 : index
    %c0_3 = arith.constant 0 : index
    %3 = vector.load %arg3[%c1, %c0_3] : memref<8x512xf32, #tpu.memory_space<vmem>>, vector<1x512xf32>
    %c2 = arith.constant 2 : index
    %c0_4 = arith.constant 0 : index
    %4 = vector.load %arg3[%c2, %c0_4] : memref<8x512xf32, #tpu.memory_space<vmem>>, vector<1x512xf32>
    %c3 = arith.constant 3 : index
    %c0_5 = arith.constant 0 : index
    %5 = vector.load %arg3[%c3, %c0_5] : memref<8x512xf32, #tpu.memory_space<vmem>>, vector<1x16xf32>
    %c4 = arith.constant 4 : index
    %c0_6 = arith.constant 0 : index
    %6 = vector.load %arg3[%c4, %c0_6] : memref<8x512xf32, #tpu.memory_space<vmem>>, vector<1x16xf32>
    %c0_7 = arith.constant 0 : index
    %c0_8 = arith.constant 0 : index
    %7 = vector.load %arg2[%c0_7, %c0_8] : memref<576x512xbf16, #tpu.memory_space<vmem>>, vector<32x512xbf16>
    %cst = arith.constant dense<0.000000e+00> : vector<8x512xf32>
    %8 = tpu.matmul %1, %7, %cst {dimension_numbers = #tpu.dot_dimension_numbers<[1], [0], [0], [1], [0, 0, 1, 1], [], []>} : vector<8x32xbf16>, vector<32x512xbf16>, vector<8x512xf32> -> vector<8x512xf32>
    %9 = vector.broadcast %2 : vector<1x512xf32> to vector<8x512xf32>
    %10 = arith.addf %8, %9 : vector<8x512xf32>
    %cst_9 = arith.constant 0.000000e+00 : f32
    %11 = vector.broadcast %cst_9 : f32 to vector<8x512xf32>
    %12 = arith.cmpf ogt, %10, %11 : vector<8x512xf32>
    %cst_10 = arith.constant 0.000000e+00 : f32
    %13 = vector.broadcast %cst_10 : f32 to vector<8x512xf32>
    %14 = arith.minimumf %10, %13 : vector<8x512xf32>
    %15 = math.exp %14 : vector<8x512xf32>
    %cst_11 = arith.constant 1.000000e+00 : f32
    %16 = vector.broadcast %cst_11 : f32 to vector<8x512xf32>
    %17 = arith.subf %15, %16 : vector<8x512xf32>
    %18 = arith.select %12, %10, %17 : vector<8x512xi1>, vector<8x512xf32>
    %c32 = arith.constant 32 : index
    %c0_12 = arith.constant 0 : index
    %19 = vector.load %arg2[%c32, %c0_12] : memref<576x512xbf16, #tpu.memory_space<vmem>>, vector<256x512xbf16>
    %20 = vector.extract_strided_slice %18 {offsets = [0, 0], sizes = [8, 256], strides = [1, 1]} : vector<8x512xf32> to vector<8x256xf32>
    %21 = arith.truncf %20 : vector<8x256xf32> to vector<8x256xbf16>
    %cst_13 = arith.constant dense<0.000000e+00> : vector<8x512xf32>
    %22 = tpu.matmul %21, %19, %cst_13 {dimension_numbers = #tpu.dot_dimension_numbers<[1], [0], [0], [1], [0, 0, 1, 1], [], []>} : vector<8x256xbf16>, vector<256x512xbf16>, vector<8x512xf32> -> vector<8x512xf32>
    %23 = vector.broadcast %3 : vector<1x512xf32> to vector<8x512xf32>
    %24 = arith.addf %22, %23 : vector<8x512xf32>
    %cst_14 = arith.constant 0.000000e+00 : f32
    %25 = vector.broadcast %cst_14 : f32 to vector<8x512xf32>
    %26 = arith.cmpf ogt, %24, %25 : vector<8x512xf32>
    %cst_15 = arith.constant 0.000000e+00 : f32
    %27 = vector.broadcast %cst_15 : f32 to vector<8x512xf32>
    %28 = arith.minimumf %24, %27 : vector<8x512xf32>
    %29 = math.exp %28 : vector<8x512xf32>
    %cst_16 = arith.constant 1.000000e+00 : f32
    %30 = vector.broadcast %cst_16 : f32 to vector<8x512xf32>
    %31 = arith.subf %29, %30 : vector<8x512xf32>
    %32 = arith.select %26, %24, %31 : vector<8x512xi1>, vector<8x512xf32>
    %c288 = arith.constant 288 : index
    %c0_17 = arith.constant 0 : index
    %33 = vector.load %arg2[%c288, %c0_17] : memref<576x512xbf16, #tpu.memory_space<vmem>>, vector<256x512xbf16>
    %34 = vector.extract_strided_slice %18 {offsets = [0, 256], sizes = [8, 256], strides = [1, 1]} : vector<8x512xf32> to vector<8x256xf32>
    %35 = arith.truncf %34 : vector<8x256xf32> to vector<8x256xbf16>
    %cst_18 = arith.constant dense<0.000000e+00> : vector<8x512xf32>
    %36 = tpu.matmul %35, %33, %cst_18 {dimension_numbers = #tpu.dot_dimension_numbers<[1], [0], [0], [1], [0, 0, 1, 1], [], []>} : vector<8x256xbf16>, vector<256x512xbf16>, vector<8x512xf32> -> vector<8x512xf32>
    %37 = vector.broadcast %4 : vector<1x512xf32> to vector<8x512xf32>
    %38 = arith.addf %36, %37 : vector<8x512xf32>
    %cst_19 = arith.constant 0.000000e+00 : f32
    %39 = vector.broadcast %cst_19 : f32 to vector<8x512xf32>
    %40 = arith.cmpf ogt, %38, %39 : vector<8x512xf32>
    %cst_20 = arith.constant 0.000000e+00 : f32
    %41 = vector.broadcast %cst_20 : f32 to vector<8x512xf32>
    %42 = arith.minimumf %38, %41 : vector<8x512xf32>
    %43 = math.exp %42 : vector<8x512xf32>
    %cst_21 = arith.constant 1.000000e+00 : f32
    %44 = vector.broadcast %cst_21 : f32 to vector<8x512xf32>
    %45 = arith.subf %43, %44 : vector<8x512xf32>
    %46 = arith.select %40, %38, %45 : vector<8x512xi1>, vector<8x512xf32>
    %c544 = arith.constant 544 : index
    %c0_22 = arith.constant 0 : index
    %47 = vector.load %arg2[%c544, %c0_22] : memref<576x512xbf16, #tpu.memory_space<vmem>>, vector<16x512xbf16>
    %48 = arith.truncf %32 : vector<8x512xf32> to vector<8x512xbf16>
    %cst_23 = arith.constant dense<0.000000e+00> : vector<8x16xf32>
    %49 = tpu.matmul %48, %47, %cst_23 {dimension_numbers = #tpu.dot_dimension_numbers<[1], [1], [0], [0], [0, 0, 1, 0], [], []>} : vector<8x512xbf16>, vector<16x512xbf16>, vector<8x16xf32> -> vector<8x16xf32>
    %50 = vector.broadcast %5 : vector<1x16xf32> to vector<8x16xf32>
    %51 = arith.addf %49, %50 : vector<8x16xf32>
    %c560 = arith.constant 560 : index
    %c0_24 = arith.constant 0 : index
    %52 = vector.load %arg2[%c560, %c0_24] : memref<576x512xbf16, #tpu.memory_space<vmem>>, vector<16x512xbf16>
    %53 = arith.truncf %46 : vector<8x512xf32> to vector<8x512xbf16>
    %cst_25 = arith.constant dense<0.000000e+00> : vector<8x16xf32>
    %54 = tpu.matmul %53, %52, %cst_25 {dimension_numbers = #tpu.dot_dimension_numbers<[1], [1], [0], [0], [0, 0, 1, 0], [], []>} : vector<8x512xbf16>, vector<16x512xbf16>, vector<8x16xf32> -> vector<8x16xf32>
    %55 = vector.broadcast %6 : vector<1x16xf32> to vector<8x16xf32>
    %56 = arith.addf %54, %55 : vector<8x16xf32>
    %57 = vector.extract_strided_slice %51 {offsets = [0, 1], sizes = [8, 8], strides = [1, 1]} : vector<8x16xf32> to vector<8x8xf32>
    %58 = vector.extract_strided_slice %51 {offsets = [0, 0], sizes = [8, 1], strides = [1, 1]} : vector<8x16xf32> to vector<8x1xf32>
    %59 = vector.broadcast %58 : vector<8x1xf32> to vector<8x8xf32>
    %60 = arith.addf %59, %57 : vector<8x8xf32>
    %cst_26 = arith.constant dense<0.000000e+00> : vector<8xf32>
    %61 = vector.multi_reduction <add>, %57, %cst_26 [1] : vector<8x8xf32> to vector<8xf32>
    %62 = vector.shape_cast %61 : vector<8xf32> to vector<8x1xf32>
    %cst_27 = arith.constant 8.000000e+00 : f32
    %63 = vector.broadcast %cst_27 : f32 to vector<8x1xf32>
    %64 = arith.divf %62, %63 : vector<8x1xf32>
    %65 = vector.broadcast %64 : vector<8x1xf32> to vector<8x8xf32>
    %66 = arith.subf %60, %65 : vector<8x8xf32>
    %67 = vector.extract_strided_slice %56 {offsets = [0, 1], sizes = [8, 8], strides = [1, 1]} : vector<8x16xf32> to vector<8x8xf32>
    %68 = vector.extract_strided_slice %56 {offsets = [0, 0], sizes = [8, 1], strides = [1, 1]} : vector<8x16xf32> to vector<8x1xf32>
    %69 = vector.broadcast %68 : vector<8x1xf32> to vector<8x8xf32>
    %70 = arith.addf %69, %67 : vector<8x8xf32>
    %cst_28 = arith.constant dense<0.000000e+00> : vector<8xf32>
    %71 = vector.multi_reduction <add>, %67, %cst_28 [1] : vector<8x8xf32> to vector<8xf32>
    %72 = vector.shape_cast %71 : vector<8xf32> to vector<8x1xf32>
    %cst_29 = arith.constant 8.000000e+00 : f32
    %73 = vector.broadcast %cst_29 : f32 to vector<8x1xf32>
    %74 = arith.divf %72, %73 : vector<8x1xf32>
    %75 = vector.broadcast %74 : vector<8x1xf32> to vector<8x8xf32>
    %76 = arith.subf %70, %75 : vector<8x8xf32>
    %cst_30 = arith.constant 0.000000e+00 : f32
    %77 = vector.broadcast %cst_30 : f32 to vector<8x112xf32>
    %78 = tpu.concatenate %66, %76, %77 in 1 : vector<8x8xf32>, vector<8x8xf32>, vector<8x112xf32> -> vector<8x128xf32>
    %c0_31 = arith.constant 0 : index
    %c0_32 = arith.constant 0 : index
    %79 = vector.load %arg4[%c0_31, %c0_32] : memref<8x128xf32, #tpu.memory_space<vmem>>, vector<8x128xf32>
    tpu.vector_store %arg4[%c0_31, %c0_32], %78 {strides = array<i32>} : memref<8x128xf32, #tpu.memory_space<vmem>>, vector<8x128xf32>,
    return
  }
  func.func @transform_0(%arg0: i32) -> (i32, i32) {
    %c0_i32 = arith.constant 0 : i32
    %c0_i32_0 = arith.constant 0 : i32
    return %arg0, %c0_i32 : i32, i32
  }
  func.func @transform_1(%arg0: i32) -> (i32, i32) {
    %c0_i32 = arith.constant 0 : i32
    %c0_i32_0 = arith.constant 0 : i32
    %c0_i32_1 = arith.constant 0 : i32
    return %c0_i32, %c0_i32_0 : i32, i32
  }
  func.func @transform_2(%arg0: i32) -> (i32, i32) {
    %c0_i32 = arith.constant 0 : i32
    %c0_i32_0 = arith.constant 0 : i32
    %c0_i32_1 = arith.constant 0 : i32
    return %c0_i32, %c0_i32_0 : i32, i32
  }
  func.func @transform_3(%arg0: i32) -> (i32, i32) {
    %c0_i32 = arith.constant 0 : i32
    %c0_i32_0 = arith.constant 0 : i32
    return %arg0, %c0_i32 : i32, i32
  }
}

</mosaic_0001>

<llo_original>
// kernel: rainbow_forward.1
$region0: #{rainbow_forward.1}
  #allocation0 [shape = 'u32[]', space=smem, size = 0x4, offset = 0x4, fixed_abs, tag = 'smem constant byte address 0x4 - core index']
  #allocation1 [shape = 'u32[144,128]{1,0:T(1,128)}', space=vmem, size = 0x12000, scoped, tag = 'internal scratch']
  %s0 = inlined_call_operand.vmem [shape: f32[8,32], index: 0, kind: input, shape index: {}]
  %s1 = inlined_call_operand.hbm [shape: bf16[576,512], index: 1, kind: input, shape index: {}]
  %s2 = inlined_call_operand.hbm [shape: f32[8,512], index: 2, kind: input, shape index: {}]
  %s3 = inlined_call_operand.vmem [shape: f32[8,128], index: 3, kind: output, shape index: {}]
  %s4 = sld [smem:[#allocation0]]
  $region30: #{rainbow_forward.1} parent=0
    _
  %s6 = ssub.s32 1, %s4
  %s7 = scalar_select 0, %s6, %s4
  $region1: #{rainbow_forward.1} parent=0
    #allocation2 [shape = 'u8[589824]{0}', space=vmem, size = 0x90000, scoped, tag = 'input window, operand 1, single buffered']
    #allocation3 [shape = 's32[1]{0}', space=sflag, size = 0x4, scoped, tag = 'scoped memory for rainbow_forward.1']
    #allocation4 [shape = 'u8[16384]{0}', space=vmem, size = 0x4000, scoped, tag = 'input window, operand 2, single buffered']
    #allocation5 [shape = 's32[1]{0}', space=sflag, size = 0x4, scoped, tag = 'scoped memory for rainbow_forward.1']
    %8 = vsyncpa [#allocation3], 0
    %9 = vsyncpa [#allocation5], 0
    // Predicated region
    $region2: #{rainbow_forward.1} parent=1 // pred_check
      _
    $region3: #{rainbow_forward.1} parent=1 // pred_check_branch
      %11 = sbr.rel (0) target = $region5
    $region4: #{rainbow_forward.1} parent=1 // pred_region
      _
    $region5: #{rainbow_forward.1} parent=1 // pred_fallthru
      _
    // Predicated region
    $region6: #{rainbow_forward.1} parent=1 // pred_check
      _
    $region7: #{rainbow_forward.1} parent=1 // pred_check_branch
      %13 = sbr.rel (0) target = $region9
    $region8: #{rainbow_forward.1} parent=1 // pred_region
      %s15 = ssub.s32 18432, 18432
      %16 = vsyncadd [#allocation3], %s15
      %s17 = sshll.u32 [#allocation2], 4
      %s18 = int_to_ptr.vmem [resolvable:$true] %s17
      %23 = dma.hbm_to_vmem [thread:$0]  %s1, 18432, %s18, [#allocation3], 256, 256, 16
    $region9: #{rainbow_forward.1} parent=1 // pred_fallthru
      _
    // Predicated region
    $region10: #{rainbow_forward.1} parent=1 // pred_check
      _
    $region11: #{rainbow_forward.1} parent=1 // pred_check_branch
      %25 = sbr.rel (0) target = $region13
    $region12: #{rainbow_forward.1} parent=1 // pred_region
      %s27 = ssub.s32 512, 512
      %28 = vsyncadd [#allocation5], %s27
      %s30 = sshll.u32 [#allocation4], 4
      %s31 = int_to_ptr.vmem [resolvable:$true] %s30
      %33 = dma.hbm_to_vmem [thread:$0]  %s2, 512, %s31, [#allocation5]
    $region13: #{rainbow_forward.1} parent=1 // pred_fallthru
      _
    // Predicated region
    $region14: #{rainbow_forward.1} parent=1 // pred_check
      _
    $region15: #{rainbow_forward.1} parent=1 // pred_check_branch
      %35 = sbr.rel (0) target = $region17
    $region16: #{rainbow_forward.1} parent=1 // pred_region
      %36 = dma.done [#allocation3], 18432
    $region17: #{rainbow_forward.1} parent=1 // pred_fallthru
      _
    // Predicated region
    $region18: #{rainbow_forward.1} parent=1 // pred_check
      _
    $region19: #{rainbow_forward.1} parent=1 // pred_check_branch
      %38 = sbr.rel (0) target = $region21
    $region20: #{rainbow_forward.1} parent=1 // pred_region
      %39 = dma.done [#allocation5], 512
    $region21: #{rainbow_forward.1} parent=1 // pred_fallthru
      _
    %v41 = vld [vmem:[%s0] sm:$0xff]
    %v42 = vpack.c.bf16 %v41, %v41
    %v43 = vld [vmem:[#allocation4] ss:$8 sm:$0xf]
    %s44 = scalar_lea.vmem [#allocation4], 1
    %v45 = vld [vmem:[%s44] ss:$8 sm:$0xf]
    %s46 = scalar_lea.vmem [#allocation4], 2
    %v47 = vld [vmem:[%s46] ss:$8 sm:$0xf]
    %v48 = vld [vmem:[#allocation4 + $0x3] ss:$0 sm:$0xff]
    %v49 = vld [vmem:[#allocation4 + $0x4] ss:$0 sm:$0xff]
    %v50 = vld [vmem:[#allocation2] sm:$0xff]
    %v51 = vld [vmem:[#allocation2 + $0x8] sm:$0xff]
    %v52 = vld [vmem:[#allocation2 + $0x10] sm:$0xff]
    %v53 = vld [vmem:[#allocation2 + $0x18] sm:$0xff]
    %v54 = vld [vmem:[#allocation2 + $0x20] sm:$0xff]
    %v55 = vld [vmem:[#allocation2 + $0x28] sm:$0xff]
    %v56 = vld [vmem:[#allocation2 + $0x30] sm:$0xff]
    %v57 = vld [vmem:[#allocation2 + $0x38] sm:$0xff]
    %v59 = vlaneseq
    %v60 = vshrl.u32 %v59, 7
    %v61 = vsub.s32 0, %v60
    %v62 = vrot.slane %v43, %v61
    %v63 = vlaneseq
    %v64 = vshrl.u32 %v63, 7
    %v65 = vsub.s32 1, %v64
    %v66 = vrot.slane %v43, %v65
    %v67 = vlaneseq
    %v68 = vshrl.u32 %v67, 7
    %v69 = vsub.s32 2, %v68
    %v70 = vrot.slane %v43, %v69
    %v71 = vlaneseq
    %v72 = vshrl.u32 %v71, 7
    %v73 = vsub.s32 3, %v72
    %v74 = vrot.slane %v43, %v73
    %v87 = vunpack.c.l.b16 %v50
    %v88 = vunpack.c.h.b16 %v50
    %v89 = vunpack.c.l.b16 %v51
    %v90 = vunpack.c.h.b16 %v51
    %v91 = vunpack.c.l.b16 %v52
    %v92 = vunpack.c.h.b16 %v52
    %v93 = vunpack.c.l.b16 %v53
    %v94 = vunpack.c.h.b16 %v53
    %v95 = vunpack.c.l.b16 %v54
    %v96 = vunpack.c.h.b16 %v54
    %v97 = vunpack.c.l.b16 %v55
    %v98 = vunpack.c.h.b16 %v55
    %v99 = vunpack.c.l.b16 %v56
    %v100 = vunpack.c.h.b16 %v56
    %v101 = vunpack.c.l.b16 %v57
    %v102 = vunpack.c.h.b16 %v57
    %v103 = vpack.c.b16 %v91, %v87
    %v104 = vpack.c.b16 %v92, %v88
    %v105 = vpack.c.b16 %v93, %v89
    %v106 = vpack.c.b16 %v94, %v90
    %v107 = vpack.c.b16 %v99, %v95
    %v108 = vpack.c.b16 %v100, %v96
    %v109 = vpack.c.b16 %v101, %v97
    %v110 = vpack.c.b16 %v102, %v98
    %vm119 = vcmask 261120
    %v121 = vsel %vm119, %v42, 0
    %123 = vmatprep.subr.bf16.mxu0 %v104
    %124 = vmatpush1.bf16.msra.mxu0 %v103
    %125 = vmatprep.subr.bf16.mxu0 %v108
    %126 = vmatpush1.bf16.msra.mxu0 %v107
    %127 = vmatprep.subr.bf16.mxu0 0
    %128 = vmatpush1.bf16.msra.mxu0 0
    %129 = vmatprep.subr.bf16.mxu0 0
    %130 = vmatpush1.bf16.msra.mxu0 0
    %131 = vmatprep.subr.bf16.mxu0 0
    %132 = vmatpush1.bf16.msra.mxu0 0
    %133 = vmatprep.subr.bf16.mxu0 0
    %134 = vmatpush1.bf16.msra.mxu0 0
    %135 = vmatprep.subr.bf16.mxu0 0
    %136 = vmatpush1.bf16.msra.mxu0 0
    %137 = vmatprep.subr.bf16.mxu0 0
    %138 = vmatpush1.bf16.msra.mxu0 0
    %139 = vmatprep.subr.bf16.mxu0 0
    %140 = vmatpush1.bf16.msra.mxu0 0
    %141 = vmatprep.subr.bf16.mxu0 0
    %142 = vmatpush1.bf16.msra.mxu0 0
    %143 = vmatprep.subr.bf16.mxu0 0
    %144 = vmatpush1.bf16.msra.mxu0 0
    %145 = vmatprep.subr.bf16.mxu0 0
    %146 = vmatpush1.bf16.msra.mxu0 0
    %147 = vmatprep.subr.bf16.mxu0 0
    %148 = vmatpush1.bf16.msra.mxu0 0
    %149 = vmatprep.subr.bf16.mxu0 0
    %150 = vmatpush1.bf16.msra.mxu0 0
    %151 = vmatprep.subr.bf16.mxu0 0
    %152 = vmatpush1.bf16.msra.mxu0 0
    %153 = vmatprep.subr.bf16.mxu0 0
    %154 = vmatpush1.bf16.msra.mxu0 0
    %155 = vmatprep.mubr.bf16.mxu0 0
    %156 = vmatmul.mubr.bf16.gmra.mrb[0].mxu0 %v121
    %v157 = vpop.f32.mrb[0].mxu0
    %v158 = vadd.f32 %v62, %v157
    %v159 = vpop.f32.mrb[0].mxu0
    %v160 = vadd.f32 %v66, %v159
    %v161 = vpop.f32.mrb[0].mxu0
    %v162 = vpop.f32.mrb[0].mxu0
    %163 = vdwg.mxu0
    %164 = vmatprep.subr.bf16.mxu0 %v106
    %165 = vmatpush1.bf16.msra.mxu0 %v105
    %166 = vmatprep.subr.bf16.mxu0 %v110
    %167 = vmatpush1.bf16.msra.mxu0 %v109
    %168 = vmatprep.subr.bf16.mxu0 0
    %169 = vmatpush1.bf16.msra.mxu0 0
    %170 = vmatprep.subr.bf16.mxu0 0
    %171 = vmatpush1.bf16.msra.mxu0 0
    %172 = vmatprep.subr.bf16.mxu0 0
    %173 = vmatpush1.bf16.msra.mxu0 0
    %174 = vmatprep.subr.bf16.mxu0 0
    %175 = vmatpush1.bf16.msra.mxu0 0
    %176 = vmatprep.subr.bf16.mxu0 0
    %177 = vmatpush1.bf16.msra.mxu0 0
    %178 = vmatprep.subr.bf16.mxu0 0
    %179 = vmatpush1.bf16.msra.mxu0 0
    %180 = vmatprep.subr.bf16.mxu0 0
    %181 = vmatpush1.bf16.msra.mxu0 0
    %182 = vmatprep.subr.bf16.mxu0 0
    %183 = vmatpush1.bf16.msra.mxu0 0
    %184 = vmatprep.subr.bf16.mxu0 0
    %185 = vmatpush1.bf16.msra.mxu0 0
    %186 = vmatprep.subr.bf16.mxu0 0
    %187 = vmatpush1.bf16.msra.mxu0 0
    %188 = vmatprep.subr.bf16.mxu0 0
    %189 = vmatpush1.bf16.msra.mxu0 0
    %190 = vmatprep.subr.bf16.mxu0 0
    %191 = vmatpush1.bf16.msra.mxu0 0
    %192 = vmatprep.subr.bf16.mxu0 0
    %193 = vmatpush1.bf16.msra.mxu0 0
    %194 = vmatprep.subr.bf16.mxu0 0
    %195 = vmatpush1.bf16.msra.mxu0 0
    %196 = vmatprep.mubr.bf16.mxu0 0
    %197 = vmatmul.mubr.bf16.gmra.mrb[0].mxu0 %v121
    %v198 = vpop.f32.mrb[0].mxu0
    %v199 = vadd.f32 %v70, %v198
    %v200 = vpop.f32.mrb[0].mxu0
    %v201 = vadd.f32 %v74, %v200
    %v202 = vpop.f32.mrb[0].mxu0
    %v203 = vpop.f32.mrb[0].mxu0
    %204 = vdwg.mxu0
    %vm205 = vcmp.gt.f32.partialorder %v158, 0.0
    %vm206 = vcmp.gt.f32.partialorder %v160, 0.0
    %vm207 = vcmp.gt.f32.partialorder %v199, 0.0
    %vm208 = vcmp.gt.f32.partialorder %v201, 0.0
    %v209 = vmin.f32 %v158, 0.0
    %v210 = vmin.f32 %v160, 0.0
    %v211 = vmin.f32 %v199, 0.0
    %v212 = vmin.f32 %v201, 0.0
    %v213 = vmul.f32 %v209, 1.442695
    %v214 = vpow.pop %v213
    %v215 = vmul.f32 %v210, 1.442695
    %v216 = vpow.pop %v215
    %v217 = vmul.f32 %v211, 1.442695
    %v218 = vpow.pop %v217
    %v219 = vmul.f32 %v212, 1.442695
    %v220 = vpow.pop %v219
    %v221 = vsub.f32 %v214, 1.0
    %v222 = vsub.f32 %v216, 1.0
    %v223 = vsub.f32 %v218, 1.0
    %v224 = vsub.f32 %v220, 1.0
    %v225 = vsel %vm205, %v158, %v221
    %v226 = vsel %vm206, %v160, %v222
    %v227 = vsel %vm207, %v199, %v223
    %v228 = vsel %vm208, %v201, %v224
    %v229 = vld [vmem:[#allocation2 + $0x40] sm:$0xff]
    %v230 = vld [vmem:[#allocation2 + $0x48] sm:$0xff]
    %v231 = vld [vmem:[#allocation2 + $0x50] sm:$0xff]
    %v232 = vld [vmem:[#allocation2 + $0x58] sm:$0xff]
    %v233 = vld [vmem:[#allocation2 + $0x60] sm:$0xff]
    %v234 = vld [vmem:[#allocation2 + $0x68] sm:$0xff]
    %v235 = vld [vmem:[#allocation2 + $0x70] sm:$0xff]
    %v236 = vld [vmem:[#allocation2 + $0x78] sm:$0xff]
    %v237 = vld [vmem:[#allocation2 + $0x80] sm:$0xff]
    %v238 = vld [vmem:[#allocation2 + $0x88] sm:$0xff]
    %v239 = vld [vmem:[#allocation2 + $0x90] sm:$0xff]
    %v240 = vld [vmem:[#allocation2 + $0x98] sm:$0xff]
    %v241 = vld [vmem:[#allocation2 + $0xa0] sm:$0xff]
    %v242 = vld [vmem:[#allocation2 + $0xa8] sm:$0xff]
    %v243 = vld [vmem:[#allocation2 + $0xb0] sm:$0xff]
    %v244 = vld [vmem:[#allocation2 + $0xb8] sm:$0xff]
    %v245 = vld [vmem:[#allocation2 + $0xc0] sm:$0xff]
    %v246 = vld [vmem:[#allocation2 + $0xc8] sm:$0xff]
    %v247 = vld [vmem:[#allocation2 + $0xd0] sm:$0xff]
    %v248 = vld [vmem:[#allocation2 + $0xd8] sm:$0xff]
    %v249 = vld [vmem:[#allocation2 + $0xe0] sm:$0xff]
    %v250 = vld [vmem:[#allocation2 + $0xe8] sm:$0xff]
    %v251 = vld [vmem:[#allocation2 + $0xf0] sm:$0xff]
    %v252 = vld [vmem:[#allocation2 + $0xf8] sm:$0xff]
    %v253 = vld [vmem:[#allocation2 + $0x100] sm:$0xff]
    %v254 = vld [vmem:[#allocation2 + $0x108] sm:$0xff]
    %v255 = vld [vmem:[#allocation2 + $0x110] sm:$0xff]
    %v256 = vld [vmem:[#allocation2 + $0x118] sm:$0xff]
    %v257 = vld [vmem:[#allocation2 + $0x120] sm:$0xff]
    %v258 = vld [vmem:[#allocation2 + $0x128] sm:$0xff]
    %v259 = vld [vmem:[#allocation2 + $0x130] sm:$0xff]
    %v260 = vld [vmem:[#allocation2 + $0x138] sm:$0xff]
    %v261 = vld [vmem:[#allocation2 + $0x140] sm:$0xff]
    %v262 = vld [vmem:[#allocation2 + $0x148] sm:$0xff]
    %v263 = vld [vmem:[#allocation2 + $0x150] sm:$0xff]
    %v264 = vld [vmem:[#allocation2 + $0x158] sm:$0xff]
    %v265 = vld [vmem:[#allocation2 + $0x160] sm:$0xff]
    %v266 = vld [vmem:[#allocation2 + $0x168] sm:$0xff]
    %v267 = vld [vmem:[#allocation2 + $0x170] sm:$0xff]
    %v268 = vld [vmem:[#allocation2 + $0x178] sm:$0xff]
    %v269 = vld [vmem:[#allocation2 + $0x180] sm:$0xff]
    %v270 = vld [vmem:[#allocation2 + $0x188] sm:$0xff]
    %v271 = vld [vmem:[#allocation2 + $0x190] sm:$0xff]
    %v272 = vld [vmem:[#allocation2 + $0x198] sm:$0xff]
    %v273 = vld [vmem:[#allocation2 + $0x1a0] sm:$0xff]
    %v274 = vld [vmem:[#allocation2 + $0x1a8] sm:$0xff]
    %v275 = vld [vmem:[#allocation2 + $0x1b0] sm:$0xff]
    %v276 = vld [vmem:[#allocation2 + $0x1b8] sm:$0xff]
    %v277 = vld [vmem:[#allocation2 + $0x1c0] sm:$0xff]
    %v278 = vld [vmem:[#allocation2 + $0x1c8] sm:$0xff]
    %v279 = vld [vmem:[#allocation2 + $0x1d0] sm:$0xff]
    %v280 = vld [vmem:[#allocation2 + $0x1d8] sm:$0xff]
    %v281 = vld [vmem:[#allocation2 + $0x1e0] sm:$0xff]
    %v282 = vld [vmem:[#allocation2 + $0x1e8] sm:$0xff]
    %v283 = vld [vmem:[#allocation2 + $0x1f0] sm:$0xff]
    %v284 = vld [vmem:[#allocation2 + $0x1f8] sm:$0xff]
    %v285 = vld [vmem:[#allocation2 + $0x200] sm:$0xff]
    %v286 = vld [vmem:[#allocation2 + $0x208] sm:$0xff]
    %v287 = vld [vmem:[#allocation2 + $0x210] sm:$0xff]
    %v288 = vld [vmem:[#allocation2 + $0x218] sm:$0xff]
    %v289 = vld [vmem:[#allocation2 + $0x220] sm:$0xff]
    %v290 = vld [vmem:[#allocation2 + $0x228] sm:$0xff]
    %v291 = vld [vmem:[#allocation2 + $0x230] sm:$0xff]
    %v292 = vld [vmem:[#allocation2 + $0x238] sm:$0xff]
    %v293 = vpack.c.bf16 %v225, %v225
    %v294 = vpack.c.bf16 %v226, %v226
    %v296 = vlaneseq
    %v297 = vshrl.u32 %v296, 7
    %v298 = vsub.s32 0, %v297
    %v299 = vrot.slane %v45, %v298
    %v300 = vlaneseq
    %v301 = vshrl.u32 %v300, 7
    %v302 = vsub.s32 1, %v301
    %v303 = vrot.slane %v45, %v302
    %v304 = vlaneseq
    %v305 = vshrl.u32 %v304, 7
    %v306 = vsub.s32 2, %v305
    %v307 = vrot.slane %v45, %v306
    %v308 = vlaneseq
    %v309 = vshrl.u32 %v308, 7
    %v310 = vsub.s32 3, %v309
    %v311 = vrot.slane %v45, %v310
    %v380 = vunpack.c.l.b16 %v229
    %v381 = vunpack.c.h.b16 %v229
    %v382 = vunpack.c.l.b16 %v230
    %v383 = vunpack.c.h.b16 %v230
    %v384 = vunpack.c.l.b16 %v231
    %v385 = vunpack.c.h.b16 %v231
    %v386 = vunpack.c.l.b16 %v232
    %v387 = vunpack.c.h.b16 %v232
    %v388 = vunpack.c.l.b16 %v233
    %v389 = vunpack.c.h.b16 %v233
    %v390 = vunpack.c.l.b16 %v234
    %v391 = vunpack.c.h.b16 %v234
    %v392 = vunpack.c.l.b16 %v235
    %v393 = vunpack.c.h.b16 %v235
    %v394 = vunpack.c.l.b16 %v236
    %v395 = vunpack.c.h.b16 %v236
    %v396 = vunpack.c.l.b16 %v237
    %v397 = vunpack.c.h.b16 %v237
    %v398 = vunpack.c.l.b16 %v238
    %v399 = vunpack.c.h.b16 %v238
    %v400 = vunpack.c.l.b16 %v239
    %v401 = vunpack.c.h.b16 %v239
    %v402 = vunpack.c.l.b16 %v240
    %v403 = vunpack.c.h.b16 %v240
    %v404 = vunpack.c.l.b16 %v241
    %v405 = vunpack.c.h.b16 %v241
    %v406 = vunpack.c.l.b16 %v242
    %v407 = vunpack.c.h.b16 %v242
    %v408 = vunpack.c.l.b16 %v243
    %v409 = vunpack.c.h.b16 %v243
    %v410 = vunpack.c.l.b16 %v244
    %v411 = vunpack.c.h.b16 %v244
    %v412 = vunpack.c.l.b16 %v245
    %v413 = vunpack.c.h.b16 %v245
    %v414 = vunpack.c.l.b16 %v246
    %v415 = vunpack.c.h.b16 %v246
    %v416 = vunpack.c.l.b16 %v247
    %v417 = vunpack.c.h.b16 %v247
    %v418 = vunpack.c.l.b16 %v248
    %v419 = vunpack.c.h.b16 %v248
    %v420 = vunpack.c.l.b16 %v249
    %v421 = vunpack.c.h.b16 %v249
    %v422 = vunpack.c.l.b16 %v250
    %v423 = vunpack.c.h.b16 %v250
    %v424 = vunpack.c.l.b16 %v251
    %v425 = vunpack.c.h.b16 %v251
    %v426 = vunpack.c.l.b16 %v252
    %v427 = vunpack.c.h.b16 %v252
    %v428 = vunpack.c.l.b16 %v253
    %v429 = vunpack.c.h.b16 %v253
    %v430 = vunpack.c.l.b16 %v254
    %v431 = vunpack.c.h.b16 %v254
    %v432 = vunpack.c.l.b16 %v255
    %v433 = vunpack.c.h.b16 %v255
    %v434 = vunpack.c.l.b16 %v256
    %v435 = vunpack.c.h.b16 %v256
    %v436 = vunpack.c.l.b16 %v257
    %v437 = vunpack.c.h.b16 %v257
    %v438 = vunpack.c.l.b16 %v258
    %v439 = vunpack.c.h.b16 %v258
    %v440 = vunpack.c.l.b16 %v259
    %v441 = vunpack.c.h.b16 %v259
    %v442 = vunpack.c.l.b16 %v260
    %v443 = vunpack.c.h.b16 %v260
    %v444 = vunpack.c.l.b16 %v261
    %v445 = vunpack.c.h.b16 %v261
    %v446 = vunpack.c.l.b16 %v262
    %v447 = vunpack.c.h.b16 %v262
    %v448 = vunpack.c.l.b16 %v263
    %v449 = vunpack.c.h.b16 %v263
    %v450 = vunpack.c.l.b16 %v264
    %v451 = vunpack.c.h.b16 %v264
    %v452 = vunpack.c.l.b16 %v265
    %v453 = vunpack.c.h.b16 %v265
    %v454 = vunpack.c.l.b16 %v266
    %v455 = vunpack.c.h.b16 %v266
    %v456 = vunpack.c.l.b16 %v267
    %v457 = vunpack.c.h.b16 %v267
    %v458 = vunpack.c.l.b16 %v268
    %v459 = vunpack.c.h.b16 %v268
    %v460 = vunpack.c.l.b16 %v269
    %v461 = vunpack.c.h.b16 %v269
    %v462 = vunpack.c.l.b16 %v270
    %v463 = vunpack.c.h.b16 %v270
    %v464 = vunpack.c.l.b16 %v271
    %v465 = vunpack.c.h.b16 %v271
    %v466 = vunpack.c.l.b16 %v272
    %v467 = vunpack.c.h.b16 %v272
    %v468 = vunpack.c.l.b16 %v273
    %v469 = vunpack.c.h.b16 %v273
    %v470 = vunpack.c.l.b16 %v274
    %v471 = vunpack.c.h.b16 %v274
    %v472 = vunpack.c.l.b16 %v275
    %v473 = vunpack.c.h.b16 %v275
    %v474 = vunpack.c.l.b16 %v276
    %v475 = vunpack.c.h.b16 %v276
    %v476 = vunpack.c.l.b16 %v277
    %v477 = vunpack.c.h.b16 %v277
    %v478 = vunpack.c.l.b16 %v278
    %v479 = vunpack.c.h.b16 %v278
    %v480 = vunpack.c.l.b16 %v279
    %v481 = vunpack.c.h.b16 %v279
    %v482 = vunpack.c.l.b16 %v280
    %v483 = vunpack.c.h.b16 %v280
    %v484 = vunpack.c.l.b16 %v281
    %v485 = vunpack.c.h.b16 %v281
    %v486 = vunpack.c.l.b16 %v282
    %v487 = vunpack.c.h.b16 %v282
    %v488 = vunpack.c.l.b16 %v283
    %v489 = vunpack.c.h.b16 %v283
    %v490 = vunpack.c.l.b16 %v284
    %v491 = vunpack.c.h.b16 %v284
    %v492 = vunpack.c.l.b16 %v285
    %v493 = vunpack.c.h.b16 %v285
    %v494 = vunpack.c.l.b16 %v286
    %v495 = vunpack.c.h.b16 %v286
    %v496 = vunpack.c.l.b16 %v287
    %v497 = vunpack.c.h.b16 %v287
    %v498 = vunpack.c.l.b16 %v288
    %v499 = vunpack.c.h.b16 %v288
    %v500 = vunpack.c.l.b16 %v289
    %v501 = vunpack.c.h.b16 %v289
    %v502 = vunpack.c.l.b16 %v290
    %v503 = vunpack.c.h.b16 %v290
    %v504 = vunpack.c.l.b16 %v291
    %v505 = vunpack.c.h.b16 %v291
    %v506 = vunpack.c.l.b16 %v292
    %v507 = vunpack.c.h.b16 %v292
    %v508 = vpack.c.b16 %v384, %v380
    %v509 = vpack.c.b16 %v385, %v381
    %v510 = vpack.c.b16 %v386, %v382
    %v511 = vpack.c.b16 %v387, %v383
    %v512 = vpack.c.b16 %v392, %v388
    %v513 = vpack.c.b16 %v393, %v389
    %v514 = vpack.c.b16 %v394, %v390
    %v515 = vpack.c.b16 %v395, %v391
    %v516 = vpack.c.b16 %v400, %v396
    %v517 = vpack.c.b16 %v401, %v397
    %v518 = vpack.c.b16 %v402, %v398
    %v519 = vpack.c.b16 %v403, %v399
    %v520 = vpack.c.b16 %v408, %v404
    %v521 = vpack.c.b16 %v409, %v405
    %v522 = vpack.c.b16 %v410, %v406
    %v523 = vpack.c.b16 %v411, %v407
    %v524 = vpack.c.b16 %v416, %v412
    %v525 = vpack.c.b16 %v417, %v413
    %v526 = vpack.c.b16 %v418, %v414
    %v527 = vpack.c.b16 %v419, %v415
    %v528 = vpack.c.b16 %v424, %v420
    %v529 = vpack.c.b16 %v425, %v421
    %v530 = vpack.c.b16 %v426, %v422
    %v531 = vpack.c.b16 %v427, %v423
    %v532 = vpack.c.b16 %v432, %v428
    %v533 = vpack.c.b16 %v433, %v429
    %v534 = vpack.c.b16 %v434, %v430
    %v535 = vpack.c.b16 %v435, %v431
    %v536 = vpack.c.b16 %v440, %v436
    %v537 = vpack.c.b16 %v441, %v437
    %v538 = vpack.c.b16 %v442, %v438
    %v539 = vpack.c.b16 %v443, %v439
    %v540 = vpack.c.b16 %v448, %v444
    %v541 = vpack.c.b16 %v449, %v445
    %v542 = vpack.c.b16 %v450, %v446
    %v543 = vpack.c.b16 %v451, %v447
    %v544 = vpack.c.b16 %v456, %v452
    %v545 = vpack.c.b16 %v457, %v453
    %v546 = vpack.c.b16 %v458, %v454
    %v547 = vpack.c.b16 %v459, %v455
    %v548 = vpack.c.b16 %v464, %v460
    %v549 = vpack.c.b16 %v465, %v461
    %v550 = vpack.c.b16 %v466, %v462
    %v551 = vpack.c.b16 %v467, %v463
    %v552 = vpack.c.b16 %v472, %v468
    %v553 = vpack.c.b16 %v473, %v469
    %v554 = vpack.c.b16 %v474, %v470
    %v555 = vpack.c.b16 %v475, %v471
    %v556 = vpack.c.b16 %v480, %v476
    %v557 = vpack.c.b16 %v481, %v477
    %v558 = vpack.c.b16 %v482, %v478
    %v559 = vpack.c.b16 %v483, %v479
    %v560 = vpack.c.b16 %v488, %v484
    %v561 = vpack.c.b16 %v489, %v485
    %v562 = vpack.c.b16 %v490, %v486
    %v563 = vpack.c.b16 %v491, %v487
    %v564 = vpack.c.b16 %v496, %v492
    %v565 = vpack.c.b16 %v497, %v493
    %v566 = vpack.c.b16 %v498, %v494
    %v567 = vpack.c.b16 %v499, %v495
    %v568 = vpack.c.b16 %v504, %v500
    %v569 = vpack.c.b16 %v505, %v501
    %v570 = vpack.c.b16 %v506, %v502
    %v571 = vpack.c.b16 %v507, %v503
    %636 = vmatprep.subr.bf16.mxu0 %v509
    %637 = vmatpush1.bf16.msra.mxu0 %v508
    %638 = vmatprep.subr.bf16.mxu0 %v513
    %639 = vmatpush1.bf16.msra.mxu0 %v512
    %640 = vmatprep.subr.bf16.mxu0 %v517
    %641 = vmatpush1.bf16.msra.mxu0 %v516
    %642 = vmatprep.subr.bf16.mxu0 %v521
    %643 = vmatpush1.bf16.msra.mxu0 %v520
    %644 = vmatprep.subr.bf16.mxu0 %v525
    %645 = vmatpush1.bf16.msra.mxu0 %v524
    %646 = vmatprep.subr.bf16.mxu0 %v529
    %647 = vmatpush1.bf16.msra.mxu0 %v528
    %648 = vmatprep.subr.bf16.mxu0 %v533
    %649 = vmatpush1.bf16.msra.mxu0 %v532
    %650 = vmatprep.subr.bf16.mxu0 %v537
    %651 = vmatpush1.bf16.msra.mxu0 %v536
    %652 = vmatprep.subr.bf16.mxu0 %v541
    %653 = vmatpush1.bf16.msra.mxu0 %v540
    %654 = vmatprep.subr.bf16.mxu0 %v545
    %655 = vmatpush1.bf16.msra.mxu0 %v544
    %656 = vmatprep.subr.bf16.mxu0 %v549
    %657 = vmatpush1.bf16.msra.mxu0 %v548
    %658 = vmatprep.subr.bf16.mxu0 %v553
    %659 = vmatpush1.bf16.msra.mxu0 %v552
    %660 = vmatprep.subr.bf16.mxu0 %v557
    %661 = vmatpush1.bf16.msra.mxu0 %v556
    %662 = vmatprep.subr.bf16.mxu0 %v561
    %663 = vmatpush1.bf16.msra.mxu0 %v560
    %664 = vmatprep.subr.bf16.mxu0 %v565
    %665 = vmatpush1.bf16.msra.mxu0 %v564
    %666 = vmatprep.subr.bf16.mxu0 %v569
    %667 = vmatpush1.bf16.msra.mxu0 %v568
    %668 = vmatprep.mubr.bf16.mxu0 %v294
    %669 = vmatmul.mubr.bf16.gmra.mrb[0].mxu0 %v293
    %v670 = vpop.f32.mrb[0].mxu0
    %v671 = vadd.f32 %v299, %v670
    %v672 = vpop.f32.mrb[0].mxu0
    %v673 = vadd.f32 %v303, %v672
    %v674 = vpop.f32.mrb[0].mxu0
    %v675 = vpop.f32.mrb[0].mxu0
    %676 = vdwg.mxu0
    %677 = vmatprep.subr.bf16.mxu0 %v511
    %678 = vmatpush1.bf16.msra.mxu0 %v510
    %679 = vmatprep.subr.bf16.mxu0 %v515
    %680 = vmatpush1.bf16.msra.mxu0 %v514
    %681 = vmatprep.subr.bf16.mxu0 %v519
    %682 = vmatpush1.bf16.msra.mxu0 %v518
    %683 = vmatprep.subr.bf16.mxu0 %v523
    %684 = vmatpush1.bf16.msra.mxu0 %v522
    %685 = vmatprep.subr.bf16.mxu0 %v527
    %686 = vmatpush1.bf16.msra.mxu0 %v526
    %687 = vmatprep.subr.bf16.mxu0 %v531
    %688 = vmatpush1.bf16.msra.mxu0 %v530
    %689 = vmatprep.subr.bf16.mxu0 %v535
    %690 = vmatpush1.bf16.msra.mxu0 %v534
    %691 = vmatprep.subr.bf16.mxu0 %v539
    %692 = vmatpush1.bf16.msra.mxu0 %v538
    %693 = vmatprep.subr.bf16.mxu0 %v543
    %694 = vmatpush1.bf16.msra.mxu0 %v542
    %695 = vmatprep.subr.bf16.mxu0 %v547
    %696 = vmatpush1.bf16.msra.mxu0 %v546
    %697 = vmatprep.subr.bf16.mxu0 %v551
    %698 = vmatpush1.bf16.msra.mxu0 %v550
    %699 = vmatprep.subr.bf16.mxu0 %v555
    %700 = vmatpush1.bf16.msra.mxu0 %v554
    %701 = vmatprep.subr.bf16.mxu0 %v559
    %702 = vmatpush1.bf16.msra.mxu0 %v558
    %703 = vmatprep.subr.bf16.mxu0 %v563
    %704 = vmatpush1.bf16.msra.mxu0 %v562
    %705 = vmatprep.subr.bf16.mxu0 %v567
    %706 = vmatpush1.bf16.msra.mxu0 %v566
    %707 = vmatprep.subr.bf16.mxu0 %v571
    %708 = vmatpush1.bf16.msra.mxu0 %v570
    %709 = vmatprep.mubr.bf16.mxu0 %v294
    %710 = vmatmul.mubr.bf16.gmra.mrb[0].mxu0 %v293
    %v711 = vpop.f32.mrb[0].mxu0
    %v712 = vadd.f32 %v307, %v711
    %v713 = vpop.f32.mrb[0].mxu0
    %v714 = vadd.f32 %v311, %v713
    %v715 = vpop.f32.mrb[0].mxu0
    %v716 = vpop.f32.mrb[0].mxu0
    %717 = vdwg.mxu0
    %vm718 = vcmp.gt.f32.partialorder %v671, 0.0
    %vm719 = vcmp.gt.f32.partialorder %v673, 0.0
    %vm720 = vcmp.gt.f32.partialorder %v712, 0.0
    %vm721 = vcmp.gt.f32.partialorder %v714, 0.0
    %v722 = vmin.f32 %v671, 0.0
    %v723 = vmin.f32 %v673, 0.0
    %v724 = vmin.f32 %v712, 0.0
    %v725 = vmin.f32 %v714, 0.0
    %v726 = vmul.f32 %v722, 1.442695
    %v727 = vpow.pop %v726
    %v728 = vmul.f32 %v723, 1.442695
    %v729 = vpow.pop %v728
    %v730 = vmul.f32 %v724, 1.442695
    %v731 = vpow.pop %v730
    %v732 = vmul.f32 %v725, 1.442695
    %v733 = vpow.pop %v732
    %v734 = vsub.f32 %v727, 1.0
    %v735 = vsub.f32 %v729, 1.0
    %v736 = vsub.f32 %v731, 1.0
    %v737 = vsub.f32 %v733, 1.0
    %v738 = vsel %vm718, %v671, %v734
    %v739 = vsel %vm719, %v673, %v735
    %v740 = vsel %vm720, %v712, %v736
    %v741 = vsel %vm721, %v714, %v737
    %v742 = vld [vmem:[#allocation2 + $0x240] sm:$0xff]
    %v743 = vld [vmem:[#allocation2 + $0x248] sm:$0xff]
    %v744 = vld [vmem:[#allocation2 + $0x250] sm:$0xff]
    %v745 = vld [vmem:[#allocation2 + $0x258] sm:$0xff]
    %v746 = vld [vmem:[#allocation2 + $0x260] sm:$0xff]
    %v747 = vld [vmem:[#allocation2 + $0x268] sm:$0xff]
    %v748 = vld [vmem:[#allocation2 + $0x270] sm:$0xff]
    %v749 = vld [vmem:[#allocation2 + $0x278] sm:$0xff]
    %v750 = vld [vmem:[#allocation2 + $0x280] sm:$0xff]
    %v751 = vld [vmem:[#allocation2 + $0x288] sm:$0xff]
    %v752 = vld [vmem:[#allocation2 + $0x290] sm:$0xff]
    %v753 = vld [vmem:[#allocation2 + $0x298] sm:$0xff]
    %v754 = vld [vmem:[#allocation2 + $0x2a0] sm:$0xff]
    %v755 = vld [vmem:[#allocation2 + $0x2a8] sm:$0xff]
    %v756 = vld [vmem:[#allocation2 + $0x2b0] sm:$0xff]
    %v757 = vld [vmem:[#allocation2 + $0x2b8] sm:$0xff]
    %v758 = vld [vmem:[#allocation2 + $0x2c0] sm:$0xff]
    %v759 = vld [vmem:[#allocation2 + $0x2c8] sm:$0xff]
    %v760 = vld [vmem:[#allocation2 + $0x2d0] sm:$0xff]
    %v761 = vld [vmem:[#allocation2 + $0x2d8] sm:$0xff]
    %v762 = vld [vmem:[#allocation2 + $0x2e0] sm:$0xff]
    %v763 = vld [vmem:[#allocation2 + $0x2e8] sm:$0xff]
    %v764 = vld [vmem:[#allocation2 + $0x2f0] sm:$0xff]
    %v765 = vld [vmem:[#allocation2 + $0x2f8] sm:$0xff]
    %v766 = vld [vmem:[#allocation2 + $0x300] sm:$0xff]
    %v767 = vld [vmem:[#allocation2 + $0x308] sm:$0xff]
    %v768 = vld [vmem:[#allocation2 + $0x310] sm:$0xff]
    %v769 = vld [vmem:[#allocation2 + $0x318] sm:$0xff]
    %v770 = vld [vmem:[#allocation2 + $0x320] sm:$0xff]
    %v771 = vld [vmem:[#allocation2 + $0x328] sm:$0xff]
    %v772 = vld [vmem:[#allocation2 + $0x330] sm:$0xff]
    %v773 = vld [vmem:[#allocation2 + $0x338] sm:$0xff]
    %v774 = vld [vmem:[#allocation2 + $0x340] sm:$0xff]
    %v775 = vld [vmem:[#allocation2 + $0x348] sm:$0xff]
    %v776 = vld [vmem:[#allocation2 + $0x350] sm:$0xff]
    %v777 = vld [vmem:[#allocation2 + $0x358] sm:$0xff]
    %v778 = vld [vmem:[#allocation2 + $0x360] sm:$0xff]
    %v779 = vld [vmem:[#allocation2 + $0x368] sm:$0xff]
    %v780 = vld [vmem:[#allocation2 + $0x370] sm:$0xff]
    %v781 = vld [vmem:[#allocation2 + $0x378] sm:$0xff]
    %v782 = vld [vmem:[#allocation2 + $0x380] sm:$0xff]
    %v783 = vld [vmem:[#allocation2 + $0x388] sm:$0xff]
    %v784 = vld [vmem:[#allocation2 + $0x390] sm:$0xff]
    %v785 = vld [vmem:[#allocation2 + $0x398] sm:$0xff]
    %v786 = vld [vmem:[#allocation2 + $0x3a0] sm:$0xff]
    %v787 = vld [vmem:[#allocation2 + $0x3a8] sm:$0xff]
    %v788 = vld [vmem:[#allocation2 + $0x3b0] sm:$0xff]
    %v789 = vld [vmem:[#allocation2 + $0x3b8] sm:$0xff]
    %v790 = vld [vmem:[#allocation2 + $0x3c0] sm:$0xff]
    %v791 = vld [vmem:[#allocation2 + $0x3c8] sm:$0xff]
    %v792 = vld [vmem:[#allocation2 + $0x3d0] sm:$0xff]
    %v793 = vld [vmem:[#allocation2 + $0x3d8] sm:$0xff]
    %v794 = vld [vmem:[#allocation2 + $0x3e0] sm:$0xff]
    %v795 = vld [vmem:[#allocation2 + $0x3e8] sm:$0xff]
    %v796 = vld [vmem:[#allocation2 + $0x3f0] sm:$0xff]
    %v797 = vld [vmem:[#allocation2 + $0x3f8] sm:$0xff]
    %v798 = vld [vmem:[#allocation2 + $0x400] sm:$0xff]
    %v799 = vld [vmem:[#allocation2 + $0x408] sm:$0xff]
    %v800 = vld [vmem:[#allocation2 + $0x410] sm:$0xff]
    %v801 = vld [vmem:[#allocation2 + $0x418] sm:$0xff]
    %v802 = vld [vmem:[#allocation2 + $0x420] sm:$0xff]
    %v803 = vld [vmem:[#allocation2 + $0x428] sm:$0xff]
    %v804 = vld [vmem:[#allocation2 + $0x430] sm:$0xff]
    %v805 = vld [vmem:[#allocation2 + $0x438] sm:$0xff]
    %v806 = vpack.c.bf16 %v227, %v227
    %v807 = vpack.c.bf16 %v228, %v228
    %v809 = vlaneseq
    %v810 = vshrl.u32 %v809, 7
    %v811 = vsub.s32 0, %v810
    %v812 = vrot.slane %v47, %v811
    %v813 = vlaneseq
    %v814 = vshrl.u32 %v813, 7
    %v815 = vsub.s32 1, %v814
    %v816 = vrot.slane %v47, %v815
    %v817 = vlaneseq
    %v818 = vshrl.u32 %v817, 7
    %v819 = vsub.s32 2, %v818
    %v820 = vrot.slane %v47, %v819
    %v821 = vlaneseq
    %v822 = vshrl.u32 %v821, 7
    %v823 = vsub.s32 3, %v822
    %v824 = vrot.slane %v47, %v823
    %v893 = vunpack.c.l.b16 %v742
    %v894 = vunpack.c.h.b16 %v742
    %v895 = vunpack.c.l.b16 %v743
    %v896 = vunpack.c.h.b16 %v743
    %v897 = vunpack.c.l.b16 %v744
    %v898 = vunpack.c.h.b16 %v744
    %v899 = vunpack.c.l.b16 %v745
    %v900 = vunpack.c.h.b16 %v745
    %v901 = vunpack.c.l.b16 %v746
    %v902 = vunpack.c.h.b16 %v746
    %v903 = vunpack.c.l.b16 %v747
    %v904 = vunpack.c.h.b16 %v747
    %v905 = vunpack.c.l.b16 %v748
    %v906 = vunpack.c.h.b16 %v748
    %v907 = vunpack.c.l.b16 %v749
    %v908 = vunpack.c.h.b16 %v749
    %v909 = vunpack.c.l.b16 %v750
    %v910 = vunpack.c.h.b16 %v750
    %v911 = vunpack.c.l.b16 %v751
    %v912 = vunpack.c.h.b16 %v751
    %v913 = vunpack.c.l.b16 %v752
    %v914 = vunpack.c.h.b16 %v752
    %v915 = vunpack.c.l.b16 %v753
    %v916 = vunpack.c.h.b16 %v753
    %v917 = vunpack.c.l.b16 %v754
    %v918 = vunpack.c.h.b16 %v754
    %v919 = vunpack.c.l.b16 %v755
    %v920 = vunpack.c.h.b16 %v755
    %v921 = vunpack.c.l.b16 %v756
    %v922 = vunpack.c.h.b16 %v756
    %v923 = vunpack.c.l.b16 %v757
    %v924 = vunpack.c.h.b16 %v757
    %v925 = vunpack.c.l.b16 %v758
    %v926 = vunpack.c.h.b16 %v758
    %v927 = vunpack.c.l.b16 %v759
    %v928 = vunpack.c.h.b16 %v759
    %v929 = vunpack.c.l.b16 %v760
    %v930 = vunpack.c.h.b16 %v760
    %v931 = vunpack.c.l.b16 %v761
    %v932 = vunpack.c.h.b16 %v761
    %v933 = vunpack.c.l.b16 %v762
    %v934 = vunpack.c.h.b16 %v762
    %v935 = vunpack.c.l.b16 %v763
    %v936 = vunpack.c.h.b16 %v763
    %v937 = vunpack.c.l.b16 %v764
    %v938 = vunpack.c.h.b16 %v764
    %v939 = vunpack.c.l.b16 %v765
    %v940 = vunpack.c.h.b16 %v765
    %v941 = vunpack.c.l.b16 %v766
    %v942 = vunpack.c.h.b16 %v766
    %v943 = vunpack.c.l.b16 %v767
    %v944 = vunpack.c.h.b16 %v767
    %v945 = vunpack.c.l.b16 %v768
    %v946 = vunpack.c.h.b16 %v768
    %v947 = vunpack.c.l.b16 %v769
    %v948 = vunpack.c.h.b16 %v769
    %v949 = vunpack.c.l.b16 %v770
    %v950 = vunpack.c.h.b16 %v770
    %v951 = vunpack.c.l.b16 %v771
    %v952 = vunpack.c.h.b16 %v771
    %v953 = vunpack.c.l.b16 %v772
    %v954 = vunpack.c.h.b16 %v772
    %v955 = vunpack.c.l.b16 %v773
    %v956 = vunpack.c.h.b16 %v773
    %v957 = vunpack.c.l.b16 %v774
    %v958 = vunpack.c.h.b16 %v774
    %v959 = vunpack.c.l.b16 %v775
    %v960 = vunpack.c.h.b16 %v775
    %v961 = vunpack.c.l.b16 %v776
    %v962 = vunpack.c.h.b16 %v776
    %v963 = vunpack.c.l.b16 %v777
    %v964 = vunpack.c.h.b16 %v777
    %v965 = vunpack.c.l.b16 %v778
    %v966 = vunpack.c.h.b16 %v778
    %v967 = vunpack.c.l.b16 %v779
    %v968 = vunpack.c.h.b16 %v779
    %v969 = vunpack.c.l.b16 %v780
    %v970 = vunpack.c.h.b16 %v780
    %v971 = vunpack.c.l.b16 %v781
    %v972 = vunpack.c.h.b16 %v781
    %v973 = vunpack.c.l.b16 %v782
    %v974 = vunpack.c.h.b16 %v782
    %v975 = vunpack.c.l.b16 %v783
    %v976 = vunpack.c.h.b16 %v783
    %v977 = vunpack.c.l.b16 %v784
    %v978 = vunpack.c.h.b16 %v784
    %v979 = vunpack.c.l.b16 %v785
    %v980 = vunpack.c.h.b16 %v785
    %v981 = vunpack.c.l.b16 %v786
    %v982 = vunpack.c.h.b16 %v786
    %v983 = vunpack.c.l.b16 %v787
    %v984 = vunpack.c.h.b16 %v787
    %v985 = vunpack.c.l.b16 %v788
    %v986 = vunpack.c.h.b16 %v788
    %v987 = vunpack.c.l.b16 %v789
    %v988 = vunpack.c.h.b16 %v789
    %v989 = vunpack.c.l.b16 %v790
    %v990 = vunpack.c.h.b16 %v790
    %v991 = vunpack.c.l.b16 %v791
    %v992 = vunpack.c.h.b16 %v791
    %v993 = vunpack.c.l.b16 %v792
    %v994 = vunpack.c.h.b16 %v792
    %v995 = vunpack.c.l.b16 %v793
    %v996 = vunpack.c.h.b16 %v793
    %v997 = vunpack.c.l.b16 %v794
    %v998 = vunpack.c.h.b16 %v794
    %v999 = vunpack.c.l.b16 %v795
    %v1000 = vunpack.c.h.b16 %v795
    %v1001 = vunpack.c.l.b16 %v796
    %v1002 = vunpack.c.h.b16 %v796
    %v1003 = vunpack.c.l.b16 %v797
    %v1004 = vunpack.c.h.b16 %v797
    %v1005 = vunpack.c.l.b16 %v798
    %v1006 = vunpack.c.h.b16 %v798
    %v1007 = vunpack.c.l.b16 %v799
    %v1008 = vunpack.c.h.b16 %v799
    %v1009 = vunpack.c.l.b16 %v800
    %v1010 = vunpack.c.h.b16 %v800
    %v1011 = vunpack.c.l.b16 %v801
    %v1012 = vunpack.c.h.b16 %v801
    %v1013 = vunpack.c.l.b16 %v802
    %v1014 = vunpack.c.h.b16 %v802
    %v1015 = vunpack.c.l.b16 %v803
    %v1016 = vunpack.c.h.b16 %v803
    %v1017 = vunpack.c.l.b16 %v804
    %v1018 = vunpack.c.h.b16 %v804
    %v1019 = vunpack.c.l.b16 %v805
    %v1020 = vunpack.c.h.b16 %v805
    %v1021 = vpack.c.b16 %v897, %v893
    %v1022 = vpack.c.b16 %v898, %v894
    %v1023 = vpack.c.b16 %v899, %v895
    %v1024 = vpack.c.b16 %v900, %v896
    %v1025 = vpack.c.b16 %v905, %v901
    %v1026 = vpack.c.b16 %v906, %v902
    %v1027 = vpack.c.b16 %v907, %v903
    %v1028 = vpack.c.b16 %v908, %v904
    %v1029 = vpack.c.b16 %v913, %v909
    %v1030 = vpack.c.b16 %v914, %v910
    %v1031 = vpack.c.b16 %v915, %v911
    %v1032 = vpack.c.b16 %v916, %v912
    %v1033 = vpack.c.b16 %v921, %v917
    %v1034 = vpack.c.b16 %v922, %v918
    %v1035 = vpack.c.b16 %v923, %v919
    %v1036 = vpack.c.b16 %v924, %v920
    %v1037 = vpack.c.b16 %v929, %v925
    %v1038 = vpack.c.b16 %v930, %v926
    %v1039 = vpack.c.b16 %v931, %v927
    %v1040 = vpack.c.b16 %v932, %v928
    %v1041 = vpack.c.b16 %v937, %v933
    %v1042 = vpack.c.b16 %v938, %v934
    %v1043 = vpack.c.b16 %v939, %v935
    %v1044 = vpack.c.b16 %v940, %v936
    %v1045 = vpack.c.b16 %v945, %v941
    %v1046 = vpack.c.b16 %v946, %v942
    %v1047 = vpack.c.b16 %v947, %v943
    %v1048 = vpack.c.b16 %v948, %v944
    %v1049 = vpack.c.b16 %v953, %v949
    %v1050 = vpack.c.b16 %v954, %v950
    %v1051 = vpack.c.b16 %v955, %v951
    %v1052 = vpack.c.b16 %v956, %v952
    %v1053 = vpack.c.b16 %v961, %v957
    %v1054 = vpack.c.b16 %v962, %v958
    %v1055 = vpack.c.b16 %v963, %v959
    %v1056 = vpack.c.b16 %v964, %v960
    %v1057 = vpack.c.b16 %v969, %v965
    %v1058 = vpack.c.b16 %v970, %v966
    %v1059 = vpack.c.b16 %v971, %v967
    %v1060 = vpack.c.b16 %v972, %v968
    %v1061 = vpack.c.b16 %v977, %v973
    %v1062 = vpack.c.b16 %v978, %v974
    %v1063 = vpack.c.b16 %v979, %v975
    %v1064 = vpack.c.b16 %v980, %v976
    %v1065 = vpack.c.b16 %v985, %v981
    %v1066 = vpack.c.b16 %v986, %v982
    %v1067 = vpack.c.b16 %v987, %v983
    %v1068 = vpack.c.b16 %v988, %v984
    %v1069 = vpack.c.b16 %v993, %v989
    %v1070 = vpack.c.b16 %v994, %v990
    %v1071 = vpack.c.b16 %v995, %v991
    %v1072 = vpack.c.b16 %v996, %v992
    %v1073 = vpack.c.b16 %v1001, %v997
    %v1074 = vpack.c.b16 %v1002, %v998
    %v1075 = vpack.c.b16 %v1003, %v999
    %v1076 = vpack.c.b16 %v1004, %v1000
    %v1077 = vpack.c.b16 %v1009, %v1005
    %v1078 = vpack.c.b16 %v1010, %v1006
    %v1079 = vpack.c.b16 %v1011, %v1007
    %v1080 = vpack.c.b16 %v1012, %v1008
    %v1081 = vpack.c.b16 %v1017, %v1013
    %v1082 = vpack.c.b16 %v1018, %v1014
    %v1083 = vpack.c.b16 %v1019, %v1015
    %v1084 = vpack.c.b16 %v1020, %v1016
    %1149 = vmatprep.subr.bf16.mxu0 %v1022
    %1150 = vmatpush1.bf16.msra.mxu0 %v1021
    %1151 = vmatprep.subr.bf16.mxu0 %v1026
    %1152 = vmatpush1.bf16.msra.mxu0 %v1025
    %1153 = vmatprep.subr.bf16.mxu0 %v1030
    %1154 = vmatpush1.bf16.msra.mxu0 %v1029
    %1155 = vmatprep.subr.bf16.mxu0 %v1034
    %1156 = vmatpush1.bf16.msra.mxu0 %v1033
    %1157 = vmatprep.subr.bf16.mxu0 %v1038
    %1158 = vmatpush1.bf16.msra.mxu0 %v1037
    %1159 = vmatprep.subr.bf16.mxu0 %v1042
    %1160 = vmatpush1.bf16.msra.mxu0 %v1041
    %1161 = vmatprep.subr.bf16.mxu0 %v1046
    %1162 = vmatpush1.bf16.msra.mxu0 %v1045
    %1163 = vmatprep.subr.bf16.mxu0 %v1050
    %1164 = vmatpush1.bf16.msra.mxu0 %v1049
    %1165 = vmatprep.subr.bf16.mxu0 %v1054
    %1166 = vmatpush1.bf16.msra.mxu0 %v1053
    %1167 = vmatprep.subr.bf16.mxu0 %v1058
    %1168 = vmatpush1.bf16.msra.mxu0 %v1057
    %1169 = vmatprep.subr.bf16.mxu0 %v1062
    %1170 = vmatpush1.bf16.msra.mxu0 %v1061
    %1171 = vmatprep.subr.bf16.mxu0 %v1066
    %1172 = vmatpush1.bf16.msra.mxu0 %v1065
    %1173 = vmatprep.subr.bf16.mxu0 %v1070
    %1174 = vmatpush1.bf16.msra.mxu0 %v1069
    %1175 = vmatprep.subr.bf16.mxu0 %v1074
    %1176 = vmatpush1.bf16.msra.mxu0 %v1073
    %1177 = vmatprep.subr.bf16.mxu0 %v1078
    %1178 = vmatpush1.bf16.msra.mxu0 %v1077
    %1179 = vmatprep.subr.bf16.mxu0 %v1082
    %1180 = vmatpush1.bf16.msra.mxu0 %v1081
    %1181 = vmatprep.mubr.bf16.mxu0 %v807
    %1182 = vmatmul.mubr.bf16.gmra.mrb[0].mxu0 %v806
    %v1183 = vpop.f32.mrb[0].mxu0
    %v1184 = vadd.f32 %v812, %v1183
    %v1185 = vpop.f32.mrb[0].mxu0
    %v1186 = vadd.f32 %v816, %v1185
    %v1187 = vpop.f32.mrb[0].mxu0
    %v1188 = vpop.f32.mrb[0].mxu0
    %1189 = vdwg.mxu0
    %1190 = vmatprep.subr.bf16.mxu0 %v1024
    %1191 = vmatpush1.bf16.msra.mxu0 %v1023
    %1192 = vmatprep.subr.bf16.mxu0 %v1028
    %1193 = vmatpush1.bf16.msra.mxu0 %v1027
    %1194 = vmatprep.subr.bf16.mxu0 %v1032
    %1195 = vmatpush1.bf16.msra.mxu0 %v1031
    %1196 = vmatprep.subr.bf16.mxu0 %v1036
    %1197 = vmatpush1.bf16.msra.mxu0 %v1035
    %1198 = vmatprep.subr.bf16.mxu0 %v1040
    %1199 = vmatpush1.bf16.msra.mxu0 %v1039
    %1200 = vmatprep.subr.bf16.mxu0 %v1044
    %1201 = vmatpush1.bf16.msra.mxu0 %v1043
    %1202 = vmatprep.subr.bf16.mxu0 %v1048
    %1203 = vmatpush1.bf16.msra.mxu0 %v1047
    %1204 = vmatprep.subr.bf16.mxu0 %v1052
    %1205 = vmatpush1.bf16.msra.mxu0 %v1051
    %1206 = vmatprep.subr.bf16.mxu0 %v1056
    %1207 = vmatpush1.bf16.msra.mxu0 %v1055
    %1208 = vmatprep.subr.bf16.mxu0 %v1060
    %1209 = vmatpush1.bf16.msra.mxu0 %v1059
    %1210 = vmatprep.subr.bf16.mxu0 %v1064
    %1211 = vmatpush1.bf16.msra.mxu0 %v1063
    %1212 = vmatprep.subr.bf16.mxu0 %v1068
    %1213 = vmatpush1.bf16.msra.mxu0 %v1067
    %1214 = vmatprep.subr.bf16.mxu0 %v1072
    %1215 = vmatpush1.bf16.msra.mxu0 %v1071
    %1216 = vmatprep.subr.bf16.mxu0 %v1076
    %1217 = vmatpush1.bf16.msra.mxu0 %v1075
    %1218 = vmatprep.subr.bf16.mxu0 %v1080
    %1219 = vmatpush1.bf16.msra.mxu0 %v1079
    %1220 = vmatprep.subr.bf16.mxu0 %v1084
    %1221 = vmatpush1.bf16.msra.mxu0 %v1083
    %1222 = vmatprep.mubr.bf16.mxu0 %v807
    %1223 = vmatmul.mubr.bf16.gmra.mrb[0].mxu0 %v806
    %v1224 = vpop.f32.mrb[0].mxu0
    %v1225 = vadd.f32 %v820, %v1224
    %v1226 = vpop.f32.mrb[0].mxu0
    %v1227 = vadd.f32 %v824, %v1226
    %v1228 = vpop.f32.mrb[0].mxu0
    %v1229 = vpop.f32.mrb[0].mxu0
    %1230 = vdwg.mxu0
    %vm1231 = vcmp.gt.f32.partialorder %v1184, 0.0
    %vm1232 = vcmp.gt.f32.partialorder %v1186, 0.0
    %vm1233 = vcmp.gt.f32.partialorder %v1225, 0.0
    %vm1234 = vcmp.gt.f32.partialorder %v1227, 0.0
    %v1235 = vmin.f32 %v1184, 0.0
    %v1236 = vmin.f32 %v1186, 0.0
    %v1237 = vmin.f32 %v1225, 0.0
    %v1238 = vmin.f32 %v1227, 0.0
    %v1239 = vmul.f32 %v1235, 1.442695
    %v1240 = vpow.pop %v1239
    %v1241 = vmul.f32 %v1236, 1.442695
    %v1242 = vpow.pop %v1241
    %v1243 = vmul.f32 %v1237, 1.442695
    %v1244 = vpow.pop %v1243
    %v1245 = vmul.f32 %v1238, 1.442695
    %v1246 = vpow.pop %v1245
    %v1247 = vsub.f32 %v1240, 1.0
    %v1248 = vsub.f32 %v1242, 1.0
    %v1249 = vsub.f32 %v1244, 1.0
    %v1250 = vsub.f32 %v1246, 1.0
    %v1251 = vsel %vm1231, %v1184, %v1247
    %v1252 = vsel %vm1232, %v1186, %v1248
    %v1253 = vsel %vm1233, %v1225, %v1249
    %v1254 = vsel %vm1234, %v1227, %v1250
    %v1255 = vld [vmem:[#allocation2 + $0x440] sm:$0xff]
    %v1256 = vld [vmem:[#allocation2 + $0x448] sm:$0xff]
    %v1257 = vld [vmem:[#allocation2 + $0x450] sm:$0xff]
    %v1258 = vld [vmem:[#allocation2 + $0x458] sm:$0xff]
    %v1259 = vpack.c.bf16 %v738, %v738
    %v1260 = vpack.c.bf16 %v739, %v739
    %v1261 = vpack.c.bf16 %v740, %v740
    %v1262 = vpack.c.bf16 %v741, %v741
    %v1267 = vunpack.c.l.b16 %v1255
    %v1268 = vunpack.c.h.b16 %v1255
    %v1269 = vunpack.c.l.b16 %v1256
    %v1270 = vunpack.c.h.b16 %v1256
    %v1271 = vunpack.c.l.b16 %v1257
    %v1272 = vunpack.c.h.b16 %v1257
    %v1273 = vunpack.c.l.b16 %v1258
    %v1274 = vunpack.c.h.b16 %v1258
    %v1275 = vpack.c.b16 %v1271, %v1267
    %v1276 = vpack.c.b16 %v1272, %v1268
    %v1277 = vpack.c.b16 %v1273, %v1269
    %v1278 = vpack.c.b16 %v1274, %v1270
    %1283 = vmatprep.subr.bf16.mxu0 %v1276
    %1284 = vmatpush1.bf16.xpose.msra.mxu0 %v1275
    %1285 = vmatprep.subr.bf16.mxu0 0
    %1286 = vmatpush1.bf16.xpose.msra.mxu0 0
    %1287 = vmatprep.subr.bf16.mxu0 0
    %1288 = vmatpush1.bf16.xpose.msra.mxu0 0
    %1289 = vmatprep.subr.bf16.mxu0 0
    %1290 = vmatpush1.bf16.xpose.msra.mxu0 0
    %1291 = vmatprep.subr.bf16.mxu0 0
    %1292 = vmatpush1.bf16.xpose.msra.mxu0 0
    %1293 = vmatprep.subr.bf16.mxu0 0
    %1294 = vmatpush1.bf16.xpose.msra.mxu0 0
    %1295 = vmatprep.subr.bf16.mxu0 0
    %1296 = vmatpush1.bf16.xpose.msra.mxu0 0
    %1297 = vmatprep.subr.bf16.mxu0 0
    %1298 = vmatpush1.bf16.xpose.msra.mxu0 0
    %1299 = vmatprep.subr.bf16.mxu0 0
    %1300 = vmatpush1.bf16.xpose.msra.mxu0 0
    %1301 = vmatprep.subr.bf16.mxu0 0
    %1302 = vmatpush1.bf16.xpose.msra.mxu0 0
    %1303 = vmatprep.subr.bf16.mxu0 0
    %1304 = vmatpush1.bf16.xpose.msra.mxu0 0
    %1305 = vmatprep.subr.bf16.mxu0 0
    %1306 = vmatpush1.bf16.xpose.msra.mxu0 0
    %1307 = vmatprep.subr.bf16.mxu0 0
    %1308 = vmatpush1.bf16.xpose.msra.mxu0 0
    %1309 = vmatprep.subr.bf16.mxu0 0
    %1310 = vmatpush1.bf16.xpose.msra.mxu0 0
    %1311 = vmatprep.subr.bf16.mxu0 0
    %1312 = vmatpush1.bf16.xpose.msra.mxu0 0
    %1313 = vmatprep.subr.bf16.mxu0 0
    %1314 = vmatpush1.bf16.xpose.msra.mxu0 0
    %1315 = vmatprep.mubr.bf16.mxu0 %v1260
    %1316 = vmatmul.mubr.bf16.gmra.mrb[0].mxu0 %v1259
    %v1317 = vpop.f32.mrb[0].mxu0
    %v1318 = vadd.f32 %v48, %v1317
    %v1319 = vpop.f32.mrb[0].mxu0
    %v1320 = vpop.f32.mrb[0].mxu0
    %v1321 = vpop.f32.mrb[0].mxu0
    %1322 = vdwg.mxu0
    %1323 = vmatprep.subr.bf16.mxu0 %v1278
    %1324 = vmatpush1.bf16.xpose.msra.mxu0 %v1277
    %1325 = vmatprep.subr.bf16.mxu0 0
    %1326 = vmatpush1.bf16.xpose.msra.mxu0 0
    %1327 = vmatprep.subr.bf16.mxu0 0
    %1328 = vmatpush1.bf16.xpose.msra.mxu0 0
    %1329 = vmatprep.subr.bf16.mxu0 0
    %1330 = vmatpush1.bf16.xpose.msra.mxu0 0
    %1331 = vmatprep.subr.bf16.mxu0 0
    %1332 = vmatpush1.bf16.xpose.msra.mxu0 0
    %1333 = vmatprep.subr.bf16.mxu0 0
    %1334 = vmatpush1.bf16.xpose.msra.mxu0 0
    %1335 = vmatprep.subr.bf16.mxu0 0
    %1336 = vmatpush1.bf16.xpose.msra.mxu0 0
    %1337 = vmatprep.subr.bf16.mxu0 0
    %1338 = vmatpush1.bf16.xpose.msra.mxu0 0
    %1339 = vmatprep.subr.bf16.mxu0 0
    %1340 = vmatpush1.bf16.xpose.msra.mxu0 0
    %1341 = vmatprep.subr.bf16.mxu0 0
    %1342 = vmatpush1.bf16.xpose.msra.mxu0 0
    %1343 = vmatprep.subr.bf16.mxu0 0
    %1344 = vmatpush1.bf16.xpose.msra.mxu0 0
    %1345 = vmatprep.subr.bf16.mxu0 0
    %1346 = vmatpush1.bf16.xpose.msra.mxu0 0
    %1347 = vmatprep.subr.bf16.mxu0 0
    %1348 = vmatpush1.bf16.xpose.msra.mxu0 0
    %1349 = vmatprep.subr.bf16.mxu0 0
    %1350 = vmatpush1.bf16.xpose.msra.mxu0 0
    %1351 = vmatprep.subr.bf16.mxu0 0
    %1352 = vmatpush1.bf16.xpose.msra.mxu0 0
    %1353 = vmatprep.subr.bf16.mxu0 0
    %1354 = vmatpush1.bf16.xpose.msra.mxu0 0
    %1355 = vmatprep.mubr.bf16.mxu0 %v1262
    %1356 = vmatmul.mubr.bf16.gmra.mrb[0].mxu0 %v1261
    %v1357 = vpop.f32.mrb[0].mxu0
    %v1358 = vadd.f32 %v1318, %v1357
    %v1359 = vpop.f32.mrb[0].mxu0
    %v1360 = vpop.f32.mrb[0].mxu0
    %v1361 = vpop.f32.mrb[0].mxu0
    %1362 = vdwg.mxu0
    %v1363 = vld [vmem:[#allocation2 + $0x460] sm:$0xff]
    %v1364 = vld [vmem:[#allocation2 + $0x468] sm:$0xff]
    %v1365 = vld [vmem:[#allocation2 + $0x470] sm:$0xff]
    %v1366 = vld [vmem:[#allocation2 + $0x478] sm:$0xff]
    %v1367 = vpack.c.bf16 %v1251, %v1251
    %v1368 = vpack.c.bf16 %v1252, %v1252
    %v1369 = vpack.c.bf16 %v1253, %v1253
    %v1370 = vpack.c.bf16 %v1254, %v1254
    %v1375 = vunpack.c.l.b16 %v1363
    %v1376 = vunpack.c.h.b16 %v1363
    %v1377 = vunpack.c.l.b16 %v1364
    %v1378 = vunpack.c.h.b16 %v1364
    %v1379 = vunpack.c.l.b16 %v1365
    %v1380 = vunpack.c.h.b16 %v1365
    %v1381 = vunpack.c.l.b16 %v1366
    %v1382 = vunpack.c.h.b16 %v1366
    %v1383 = vpack.c.b16 %v1379, %v1375
    %v1384 = vpack.c.b16 %v1380, %v1376
    %v1385 = vpack.c.b16 %v1381, %v1377
    %v1386 = vpack.c.b16 %v1382, %v1378
    %1391 = vmatprep.subr.bf16.mxu0 %v1384
    %1392 = vmatpush1.bf16.xpose.msra.mxu0 %v1383
    %1393 = vmatprep.subr.bf16.mxu0 0
    %1394 = vmatpush1.bf16.xpose.msra.mxu0 0
    %1395 = vmatprep.subr.bf16.mxu0 0
    %1396 = vmatpush1.bf16.xpose.msra.mxu0 0
    %1397 = vmatprep.subr.bf16.mxu0 0
    %1398 = vmatpush1.bf16.xpose.msra.mxu0 0
    %1399 = vmatprep.subr.bf16.mxu0 0
    %1400 = vmatpush1.bf16.xpose.msra.mxu0 0
    %1401 = vmatprep.subr.bf16.mxu0 0
    %1402 = vmatpush1.bf16.xpose.msra.mxu0 0
    %1403 = vmatprep.subr.bf16.mxu0 0
    %1404 = vmatpush1.bf16.xpose.msra.mxu0 0
    %1405 = vmatprep.subr.bf16.mxu0 0
    %1406 = vmatpush1.bf16.xpose.msra.mxu0 0
    %1407 = vmatprep.subr.bf16.mxu0 0
    %1408 = vmatpush1.bf16.xpose.msra.mxu0 0
    %1409 = vmatprep.subr.bf16.mxu0 0
    %1410 = vmatpush1.bf16.xpose.msra.mxu0 0
    %1411 = vmatprep.subr.bf16.mxu0 0
    %1412 = vmatpush1.bf16.xpose.msra.mxu0 0
    %1413 = vmatprep.subr.bf16.mxu0 0
    %1414 = vmatpush1.bf16.xpose.msra.mxu0 0
    %1415 = vmatprep.subr.bf16.mxu0 0
    %1416 = vmatpush1.bf16.xpose.msra.mxu0 0
    %1417 = vmatprep.subr.bf16.mxu0 0
    %1418 = vmatpush1.bf16.xpose.msra.mxu0 0
    %1419 = vmatprep.subr.bf16.mxu0 0
    %1420 = vmatpush1.bf16.xpose.msra.mxu0 0
    %1421 = vmatprep.subr.bf16.mxu0 0
    %1422 = vmatpush1.bf16.xpose.msra.mxu0 0
    %1423 = vmatprep.mubr.bf16.mxu0 %v1368
    %1424 = vmatmul.mubr.bf16.gmra.mrb[0].mxu0 %v1367
    %v1425 = vpop.f32.mrb[0].mxu0
    %v1426 = vadd.f32 %v49, %v1425
    %v1427 = vpop.f32.mrb[0].mxu0
    %v1428 = vpop.f32.mrb[0].mxu0
    %v1429 = vpop.f32.mrb[0].mxu0
    %1430 = vdwg.mxu0
    %1431 = vmatprep.subr.bf16.mxu0 %v1386
    %1432 = vmatpush1.bf16.xpose.msra.mxu0 %v1385
    %1433 = vmatprep.subr.bf16.mxu0 0
    %1434 = vmatpush1.bf16.xpose.msra.mxu0 0
    %1435 = vmatprep.subr.bf16.mxu0 0
    %1436 = vmatpush1.bf16.xpose.msra.mxu0 0
    %1437 = vmatprep.subr.bf16.mxu0 0
    %1438 = vmatpush1.bf16.xpose.msra.mxu0 0
    %1439 = vmatprep.subr.bf16.mxu0 0
    %1440 = vmatpush1.bf16.xpose.msra.mxu0 0
    %1441 = vmatprep.subr.bf16.mxu0 0
    %1442 = vmatpush1.bf16.xpose.msra.mxu0 0
    %1443 = vmatprep.subr.bf16.mxu0 0
    %1444 = vmatpush1.bf16.xpose.msra.mxu0 0
    %1445 = vmatprep.subr.bf16.mxu0 0
    %1446 = vmatpush1.bf16.xpose.msra.mxu0 0
    %1447 = vmatprep.subr.bf16.mxu0 0
    %1448 = vmatpush1.bf16.xpose.msra.mxu0 0
    %1449 = vmatprep.subr.bf16.mxu0 0
    %1450 = vmatpush1.bf16.xpose.msra.mxu0 0
    %1451 = vmatprep.subr.bf16.mxu0 0
    %1452 = vmatpush1.bf16.xpose.msra.mxu0 0
    %1453 = vmatprep.subr.bf16.mxu0 0
    %1454 = vmatpush1.bf16.xpose.msra.mxu0 0
    %1455 = vmatprep.subr.bf16.mxu0 0
    %1456 = vmatpush1.bf16.xpose.msra.mxu0 0
    %1457 = vmatprep.subr.bf16.mxu0 0
    %1458 = vmatpush1.bf16.xpose.msra.mxu0 0
    %1459 = vmatprep.subr.bf16.mxu0 0
    %1460 = vmatpush1.bf16.xpose.msra.mxu0 0
    %1461 = vmatprep.subr.bf16.mxu0 0
    %1462 = vmatpush1.bf16.xpose.msra.mxu0 0
    %1463 = vmatprep.mubr.bf16.mxu0 %v1370
    %1464 = vmatmul.mubr.bf16.gmra.mrb[0].mxu0 %v1369
    %v1465 = vpop.f32.mrb[0].mxu0
    %v1466 = vadd.f32 %v1426, %v1465
    %v1467 = vpop.f32.mrb[0].mxu0
    %v1468 = vpop.f32.mrb[0].mxu0
    %v1469 = vpop.f32.mrb[0].mxu0
    %1470 = vdwg.mxu0
    %1472 = vset.pattern.permute.xlu0 0
    %1473 = vperm.xlu0 %1472, %v1358
    %v1474 = vpop.permute.xlu0 %1473
    %v1476 = vadd.f32 %v1474, %v1358
    %1477 = vrot.lane.b32.xlu0 %v1358, 127
    %v1478 = vpop.permute.xlu0 %1477
    %vm1480 = vcmask 64512
    %v1481 = vsel %vm1480, %v1478, 0.0
    %1482 = vadd.xlane.f32.xlu0 %v1481
    %v1483 = vpop.xlane.xlu0 %1482
    %v1484 = vrcp.pop 8.0
    %v1485 = vmul.f32 %v1483, %v1484
    %v1486 = vsub.f32 %v1476, %v1485
    %1488 = vset.pattern.permute.xlu0 0
    %1489 = vperm.xlu0 %1488, %v1466
    %v1490 = vpop.permute.xlu0 %1489
    %v1492 = vadd.f32 %v1490, %v1466
    %1493 = vrot.lane.b32.xlu0 %v1466, 127
    %v1494 = vpop.permute.xlu0 %1493
    %v1496 = vsel %vm1480, %v1494, 0.0
    %1497 = vadd.xlane.f32.xlu0 %v1496
    %v1498 = vpop.xlane.xlu0 %1497
    %v1499 = vmul.f32 %v1498, %v1484
    %v1500 = vsub.f32 %v1492, %v1499
    %1502 = vrot.lane.b32.xlu0 %v1486, 127
    %v1503 = vpop.permute.xlu0 %1502
    %1506 = vrot.lane.b32.xlu0 %v1500, 7
    %v1507 = vpop.permute.xlu0 %1506
    %v1509 = vsel %vm1480, %v1503, %v1507
    %vm1510 = vcmask 130048
    %v1511 = vsel %vm1510, %v1509, 0.0
    %1512 = vst [vmem:[%s3] sm:$0xff] %v1511
    // Predicated region
    $region22: #{rainbow_forward.1} parent=1 // pred_check
      _
    $region23: #{rainbow_forward.1} parent=1 // pred_check_branch
      %1514 = sbr.rel (0) target = $region25
    $region24: #{rainbow_forward.1} parent=1 // pred_region
      _
    $region25: #{rainbow_forward.1} parent=1 // pred_fallthru
      _
    // Predicated region
    $region26: #{rainbow_forward.1} parent=1 // pred_check
      _
    $region27: #{rainbow_forward.1} parent=1 // pred_check_branch
      %1516 = sbr.rel (0) target = $region29
    $region28: #{rainbow_forward.1} parent=1 // pred_region
      _
    $region29: #{rainbow_forward.1} parent=1 // pred_fallthru
      _
    %1517 = vsyncpa [#allocation3], 1
    %1518 = vsyncpa [#allocation5], 1

</llo_original>
